<compile_context>
chip_gen: v5e
topology: v5e:2x2
jax: 0.10.0
libtpu: 0.0.40
codegen_flags: <defaults>
</compile_context>

<pallas_src>
import functools

import jax
import jax.numpy as jnp
from jax.experimental import pallas as pl
from jax.experimental.pallas import tpu as pltpu

# ---------------- small synthetic "BERT for sequence classification" config ----
VOCAB = 128
HIDDEN = 64
N_HEADS = 4
HEAD_DIM = HIDDEN // N_HEADS
INTERMEDIATE = 128
N_LAYERS = 2
NUM_LABELS = 2
LABEL_PAD = 128          # lane-dense padded label axis for the head outputs
MAX_POS = 16
EPS = 1e-12
NEG_INF = -1e9


def _layernorm(x, g, b):
    mu = jnp.mean(x, axis=-1, keepdims=True)
    xc = x - mu
    var = jnp.mean(xc * xc, axis=-1, keepdims=True)
    return xc * jax.lax.rsqrt(var + EPS) * g + b


# ---------------- single fused forward kernel (one grid step = whole batch) ---
def fused_sst_kernel(onehot_ref, extras_ref, bias_ref,            # precomputed data
                     wemb_ref, eg_ref, eb_ref,                     # embeddings
                     wqkv_ref, bqkv_ref, bo_ref, g1_ref, be1_ref,
                     w1_ref, fb1_ref, w2_ref, fb2_ref, g2_ref, be2_ref,
                     wp_ref, bp_ref, wc_ref, bc_ref,               # pooler + classifier
                     probs_ref, *, seq_len):
    R = extras_ref.shape[0]          # = B * seq_len (batch folded into sublanes)
    Bb = R // seq_len
    QK = 2 * HIDDEN                  # lane offset of the Wo-folded V' columns

    # ----- embeddings: one-hot MXU "gather" + precomputed pos/type term, LN ----
    x = jnp.dot(onehot_ref[...], wemb_ref[...],
                preferred_element_type=jnp.float32) + extras_ref[...]
    x = _layernorm(x, eg_ref[...], eb_ref[...])                    # [R, H] f32

    bias = bias_ref[...]             # [N*R, N*R] additive (block-diag + key mask)

    # ----- transformer encoder layers (static loop over stacked weights) -------
    for l in range(N_LAYERS):
        xb = x.astype(jnp.bfloat16)
        # packed projection: [Q(scaled) | K | V'_0..V'_{N-1}]  -> [R, 2H + N*H]
        qkv = jnp.dot(xb, wqkv_ref[l],
                      preferred_element_type=jnp.float32) + bqkv_ref[l]

        def to_rows(t):
            # [R, N*D] head lane-blocks -> [N*R, D] head sublane-blocks
            return jnp.concatenate(
                [t[:, n * HEAD_DIM:(n + 1) * HEAD_DIM] for n in range(N_HEADS)],
                axis=0).astype(jnp.bfloat16)

        q_st = to_rows(qkv[:, :HIDDEN])          # 1/sqrt(D) already in the weight
        k_st = to_rows(qkv[:, HIDDEN:QK])
        # V' already carries the folded per-head output projection: [N*R, H]
        v_st = jnp.concatenate(
            [qkv[:, QK + n * HIDDEN: QK + (n + 1) * HIDDEN] for n in range(N_HEADS)],
            axis=0).astype(jnp.bfloat16)

        # ONE block-diagonal scores matmul over all (head, batch) groups
        s = jax.lax.dot_general(q_st, k_st, (((1,), (1,)), ((), ())),
                                preferred_element_type=jnp.float32) + bias
        s = s - jnp.max(s, axis=-1, keepdims=True)
        e = jnp.exp(s)
        p = e * pl.reciprocal(jnp.sum(e, axis=-1, keepdims=True), approx=True)

        # ONE PV' matmul; head merge is a plain sum of sublane slices
        ctx = jnp.dot(p.astype(jnp.bfloat16), v_st,
                      preferred_element_type=jnp.float32)          # [N*R, H]
        attn = bo_ref[l]
        for n in range(N_HEADS):
            attn = attn + ctx[n * R:(n + 1) * R, :]
        x = _layernorm(x + attn, g1_ref[l], be1_ref[l])

        h1 = jnp.dot(x.astype(jnp.bfloat16), w1_ref[l],
                     preferred_element_type=jnp.float32) + fb1_ref[l]
        # TODO(synk): HF BERT uses exact erf GELU; tanh approximation kept for
        # guaranteed Mosaic lowering (small numeric drift vs. the original).
        h1 = jax.nn.gelu(h1, approximate=True)
        ffn = jnp.dot(h1.astype(jnp.bfloat16), w2_ref[l],
                      preferred_element_type=jnp.float32) + fb2_ref[l]
        x = _layernorm(x + ffn, g2_ref[l], be2_ref[l])

    # ----- pooler + classifier + softmax on the [CLS] rows ---------------------
    cls = jnp.concatenate(
        [x[b * seq_len: b * seq_len + 1, :] for b in range(Bb)], axis=0)   # [Bb, H]
    pooled = jnp.tanh(jnp.dot(cls.astype(jnp.bfloat16), wp_ref[...],
                              preferred_element_type=jnp.float32) + bp_ref[...])
    logits = jnp.dot(pooled.astype(jnp.bfloat16), wc_ref[...],
                     preferred_element_type=jnp.float32) + bc_ref[...]     # [Bb, 128]
    z = logits - jnp.max(logits, axis=-1, keepdims=True)
    ez = jnp.exp(z)
    probs_ref[...] = ez / jnp.sum(ez, axis=-1, keepdims=True)  # padded lanes -> 0


# ---------------- parameter init (deterministic, kernel-packed layout) --------
def init_params(key):
    keys = iter(jax.random.split(key, 16))

    def dense(shape):
        return 0.02 * jax.random.normal(next(keys), shape, jnp.float32)

    L = N_LAYERS
    scale = 1.0 / (HEAD_DIM ** 0.5)

    wq = dense((L, HIDDEN, HIDDEN)) * scale          # fold 1/sqrt(D) into Q
    wk = dense((L, HIDDEN, HIDDEN))
    wv = dense((L, HIDDEN, HIDDEN))
    wo = dense((L, HIDDEN, HIDDEN))
    # Fold the per-head output projection into the V columns:
    #   V'_n = Wv[:, n*D:(n+1)*D] @ Wo[n*D:(n+1)*D, :]    (H x H per head)
    wv4 = wv.reshape(L, HIDDEN, N_HEADS, HEAD_DIM)
    wo4 = wo.reshape(L, N_HEADS, HEAD_DIM, HIDDEN)
    wvo = jnp.einsum('lhnd,lndk->lhnk', wv4, wo4).reshape(L, HIDDEN,
                                                          N_HEADS * HIDDEN)
    wqkv = jnp.concatenate([wq, wk, wvo], axis=-1)   # [L, H, 2H + N*H]

    return {
        "word_emb": dense((VOCAB, HIDDEN)).astype(jnp.bfloat16),
        "pos_emb": dense((MAX_POS, HIDDEN)),
        "tok_emb": dense((2, HIDDEN)),
        "emb_ln_g": jnp.ones((1, HIDDEN), jnp.float32),
        "emb_ln_b": jnp.zeros((1, HIDDEN), jnp.float32),
        "wqkv": wqkv.astype(jnp.bfloat16),
        # Q/K biases; the V / output-projection biases are folded into "bo"
        # (all zero here), so the V' bias columns must stay zero.
        "bqkv": jnp.zeros((L, 1, 2 * HIDDEN + N_HEADS * HIDDEN), jnp.float32),
        "bo": jnp.zeros((L, 1, HIDDEN), jnp.float32),
        "ln1_g": jnp.ones((L, 1, HIDDEN), jnp.float32),
        "ln1_b": jnp.zeros((L, 1, HIDDEN), jnp.float32),
        "w1": dense((L, HIDDEN, INTERMEDIATE)).astype(jnp.bfloat16),
        "b1": jnp.zeros((L, 1, INTERMEDIATE), jnp.float32),
        "w2": dense((L, INTERMEDIATE, HIDDEN)).astype(jnp.bfloat16),
        "b2": jnp.zeros((L, 1, HIDDEN), jnp.float32),
        "ln2_g": jnp.ones((L, 1, HIDDEN), jnp.float32),
        "ln2_b": jnp.zeros((L, 1, HIDDEN), jnp.float32),
        "pooler_w": dense((HIDDEN, HIDDEN)).astype(jnp.bfloat16),
        "pooler_b": jnp.zeros((1, HIDDEN), jnp.float32),
        # classifier padded to a lane-dense 128-wide label axis; padded logits
        # are pinned to -1e30 through the bias so softmax ignores them.
        "cls_w": jnp.pad(dense((HIDDEN, NUM_LABELS)),
                         ((0, 0), (0, LABEL_PAD - NUM_LABELS))).astype(jnp.bfloat16),
        "cls_b": jnp.concatenate(
            [jnp.zeros((1, NUM_LABELS), jnp.float32),
             jnp.full((1, LABEL_PAD - NUM_LABELS), -1e30, jnp.float32)], axis=1),
    }


# ---------------- forward: one pallas_call, small data prep outside -----------
def sst_forward(params, input_ids, attention_mask, token_type_ids, max_seq_len):
    if max_seq_len > 0:
        input_ids = input_ids[:, :max_seq_len]
        attention_mask = attention_mask[:, :max_seq_len]
        token_type_ids = token_type_ids[:, :max_seq_len]
    B, S = input_ids.shape
    R = B * S                       # folded (batch, seq) rows
    GS = N_HEADS * R                # folded (head, batch, seq) attention rows

    ids_flat = input_ids.reshape(R).astype(jnp.int32)
    tt_flat = token_type_ids.reshape(R).astype(jnp.int32)

    # precomputed kernel inputs (a few KB of DMA; removes all in-kernel scalar work)
    onehot = jax.nn.one_hot(ids_flat, VOCAB, dtype=jnp.bfloat16)          # [R, 128]
    extras = (jnp.tile(params["pos_emb"][:S], (B, 1))
              + jnp.take(params["tok_emb"], tt_flat, axis=0)
              ).astype(jnp.float32)                                        # [R, H]
    # additive attention bias for the (head, batch)-block-diagonal scores:
    # row/col order is (head, batch, seq); valid iff same group and key unmasked.
    g_idx = jnp.arange(GS) // S
    b_idx = g_idx % B
    k_idx = jnp.arange(GS) % S
    key_ok = attention_mask[b_idx, k_idx] > 0
    valid = (g_idx[:, None] == g_idx[None, :]) & key_ok[None, :]
    attn_bias = jnp.where(valid, 0.0, NEG_INF).astype(jnp.float32)         # [GS, GS]

    tensors = [
        params["word_emb"], params["emb_ln_g"], params["emb_ln_b"],
        params["wqkv"], params["bqkv"], params["bo"],
        params["ln1_g"], params["ln1_b"],
        params["w1"], params["b1"], params["w2"], params["b2"],
        params["ln2_g"], params["ln2_b"],
        params["pooler_w"], params["pooler_b"], params["cls_w"], params["cls_b"],
    ]

    def whole(arr):
        nd = arr.ndim
        return pl.BlockSpec(arr.shape, lambda *_: (0,) * nd)

    in_specs = ([pl.BlockSpec((R, VOCAB), lambda i: (0, 0)),
                 pl.BlockSpec((R, HIDDEN), lambda i: (0, 0)),
                 pl.BlockSpec((GS, GS), lambda i: (0, 0))]
                + [whole(t) for t in tensors])
    out_specs = pl.BlockSpec((B, LABEL_PAD), lambda i: (0, 0))

    kernel = functools.partial(fused_sst_kernel, seq_len=S)

    probs_pad = pl.pallas_call(
        kernel,
        out_shape=jax.ShapeDtypeStruct((B, LABEL_PAD), jnp.float32),
        grid_spec=pltpu.PrefetchScalarGridSpec(
            num_scalar_prefetch=0,
            grid=(1,),                       # whole batch folded into one step
            in_specs=in_specs,
            out_specs=out_specs),
        compiler_params=pltpu.CompilerParams(
            dimension_semantics=("arbitrary",)),
    )(onehot, extras, attn_bias, *tensors)

    probs = probs_pad[:, :NUM_LABELS]
    preds = jnp.argmax(probs, axis=-1)       # same first-index tie-break as torch
    return probs, preds                      # (softmax probs, argmax)


if __name__ == "__main__":
    key = jax.random.PRNGKey(0)
    pkey, ikey = jax.random.split(key, 2)
    params = init_params(pkey)

    B, MAX_SEQ_LEN, RAW_SEQ = 2, 8, 12
    input_ids = jax.random.randint(ikey, (B, RAW_SEQ), 0, VOCAB, dtype=jnp.int32)
    # variable-length padding mask (row 0 has 8 real tokens, row 1 has 6)
    lengths = jnp.array([[8], [6]], dtype=jnp.int32)
    attention_mask = (jnp.arange(RAW_SEQ)[None, :] < lengths).astype(jnp.int32)
    token_type_ids = jnp.zeros((B, RAW_SEQ), dtype=jnp.int32)

    probs, preds = sst_forward(params, input_ids, attention_mask,
                               token_type_ids, max_seq_len=MAX_SEQ_LEN)
    jax.block_until_ready((probs, preds))
    assert probs.shape == (B, NUM_LABELS) and preds.shape == (B,)
    assert bool(jnp.all(jnp.isfinite(probs)))
    print("KERNEL_OK")
</pallas_src>

<mosaic_0001>
module attributes {stable_mosaic.version = 11 : i64} {
  func.func @fused_sst_kernel(%arg0: i32, %arg1: memref<16x128xbf16, #tpu.memory_space<vmem>>, %arg2: memref<16x64xf32, #tpu.memory_space<vmem>>, %arg3: memref<64x64xf32, #tpu.memory_space<vmem>>, %arg4: memref<128x64xbf16, #tpu.memory_space<vmem>>, %arg5: memref<1x64xf32, #tpu.memory_space<vmem>>, %arg6: memref<1x64xf32, #tpu.memory_space<vmem>>, %arg7: memref<2x64x384xbf16, #tpu.memory_space<vmem>>, %arg8: memref<2x1x384xf32, #tpu.memory_space<vmem>>, %arg9: memref<2x1x64xf32, #tpu.memory_space<vmem>>, %arg10: memref<2x1x64xf32, #tpu.memory_space<vmem>>, %arg11: memref<2x1x64xf32, #tpu.memory_space<vmem>>, %arg12: memref<2x64x128xbf16, #tpu.memory_space<vmem>>, %arg13: memref<2x1x128xf32, #tpu.memory_space<vmem>>, %arg14: memref<2x128x64xbf16, #tpu.memory_space<vmem>>, %arg15: memref<2x1x64xf32, #tpu.memory_space<vmem>>, %arg16: memref<2x1x64xf32, #tpu.memory_space<vmem>>, %arg17: memref<2x1x64xf32, #tpu.memory_space<vmem>>, %arg18: memref<64x64xbf16, #tpu.memory_space<vmem>>, %arg19: memref<1x64xf32, #tpu.memory_space<vmem>>, %arg20: memref<64x128xbf16, #tpu.memory_space<vmem>>, %arg21: memref<1x128xf32, #tpu.memory_space<vmem>>, %arg22: memref<2x128xf32, #tpu.memory_space<vmem>>) attributes {dimension_semantics = [#tpu.dimension_semantics<arbitrary>], iteration_bounds = array<i64: 1>, scalar_prefetch = 0 : i64, scratch_operands = 0 : i64, tpu.core_type = #tpu.core_type<tc>, window_params = [{pipeline_mode = #tpu.pipeline_mode<synchronous>, transform_indices = @transform_0, window_bounds = array<i64: 16, 128>}, {pipeline_mode = #tpu.pipeline_mode<synchronous>, transform_indices = @transform_1, window_bounds = array<i64: 16, 64>}, {pipeline_mode = #tpu.pipeline_mode<synchronous>, transform_indices = @transform_2, window_bounds = array<i64: 64, 64>}, {pipeline_mode = #tpu.pipeline_mode<synchronous>, transform_indices = @transform_3, window_bounds = array<i64: 128, 64>}, {pipeline_mode = #tpu.pipeline_mode<synchronous>, transform_indices = @transform_4, window_bounds = array<i64: 1, 64>}, {pipeline_mode = #tpu.pipeline_mode<synchronous>, transform_indices = @transform_5, window_bounds = array<i64: 1, 64>}, {pipeline_mode = #tpu.pipeline_mode<synchronous>, transform_indices = @transform_6, window_bounds = array<i64: 2, 64, 384>}, {pipeline_mode = #tpu.pipeline_mode<synchronous>, transform_indices = @transform_7, window_bounds = array<i64: 2, 1, 384>}, {pipeline_mode = #tpu.pipeline_mode<synchronous>, transform_indices = @transform_8, window_bounds = array<i64: 2, 1, 64>}, {pipeline_mode = #tpu.pipeline_mode<synchronous>, transform_indices = @transform_9, window_bounds = array<i64: 2, 1, 64>}, {pipeline_mode = #tpu.pipeline_mode<synchronous>, transform_indices = @transform_10, window_bounds = array<i64: 2, 1, 64>}, {pipeline_mode = #tpu.pipeline_mode<synchronous>, transform_indices = @transform_11, window_bounds = array<i64: 2, 64, 128>}, {pipeline_mode = #tpu.pipeline_mode<synchronous>, transform_indices = @transform_12, window_bounds = array<i64: 2, 1, 128>}, {pipeline_mode = #tpu.pipeline_mode<synchronous>, transform_indices = @transform_13, window_bounds = array<i64: 2, 128, 64>}, {pipeline_mode = #tpu.pipeline_mode<synchronous>, transform_indices = @transform_14, window_bounds = array<i64: 2, 1, 64>}, {pipeline_mode = #tpu.pipeline_mode<synchronous>, transform_indices = @transform_15, window_bounds = array<i64: 2, 1, 64>}, {pipeline_mode = #tpu.pipeline_mode<synchronous>, transform_indices = @transform_16, window_bounds = array<i64: 2, 1, 64>}, {pipeline_mode = #tpu.pipeline_mode<synchronous>, transform_indices = @transform_17, window_bounds = array<i64: 64, 64>}, {pipeline_mode = #tpu.pipeline_mode<synchronous>, transform_indices = @transform_18, window_bounds = array<i64: 1, 64>}, {pipeline_mode = #tpu.pipeline_mode<synchronous>, transform_indices = @transform_19, window_bounds = array<i64: 64, 128>}, {pipeline_mode = #tpu.pipeline_mode<synchronous>, transform_indices = @transform_20, window_bounds = array<i64: 1, 128>}, {pipeline_mode = #tpu.pipeline_mode<synchronous>, transform_indices = @transform_21, window_bounds = array<i64: 2, 128>}]} {
    %c0 = arith.constant 0 : index
    %c0_0 = arith.constant 0 : index
    %0 = vector.load %arg1[%c0, %c0_0] : memref<16x128xbf16, #tpu.memory_space<vmem>>, vector<16x128xbf16>
    %c0_1 = arith.constant 0 : index
    %c0_2 = arith.constant 0 : index
    %1 = vector.load %arg4[%c0_1, %c0_2] : memref<128x64xbf16, #tpu.memory_space<vmem>>, vector<128x64xbf16>
    %cst = arith.constant dense<0.000000e+00> : vector<16x64xf32>
    %2 = tpu.matmul %0, %1, %cst {dimension_numbers = #tpu.dot_dimension_numbers<[1], [0], [0], [1], [0, 0, 1, 1], [], []>} : vector<16x128xbf16>, vector<128x64xbf16>, vector<16x64xf32> -> vector<16x64xf32>
    %c0_3 = arith.constant 0 : index
    %c0_4 = arith.constant 0 : index
    %3 = vector.load %arg2[%c0_3, %c0_4] : memref<16x64xf32, #tpu.memory_space<vmem>>, vector<16x64xf32>
    %4 = arith.addf %2, %3 : vector<16x64xf32>
    %c0_5 = arith.constant 0 : index
    %c0_6 = arith.constant 0 : index
    %5 = vector.load %arg5[%c0_5, %c0_6] : memref<1x64xf32, #tpu.memory_space<vmem>>, vector<1x64xf32>
    %c0_7 = arith.constant 0 : index
    %c0_8 = arith.constant 0 : index
    %6 = vector.load %arg6[%c0_7, %c0_8] : memref<1x64xf32, #tpu.memory_space<vmem>>, vector<1x64xf32>
    %cst_9 = arith.constant dense<0.000000e+00> : vector<16xf32>
    %7 = vector.multi_reduction <add>, %4, %cst_9 [1] : vector<16x64xf32> to vector<16xf32>
    %8 = vector.shape_cast %7 : vector<16xf32> to vector<16x1xf32>
    %cst_10 = arith.constant 6.400000e+01 : f32
    %9 = vector.broadcast %cst_10 : f32 to vector<16x1xf32>
    %10 = arith.divf %8, %9 : vector<16x1xf32>
    %11 = vector.broadcast %10 : vector<16x1xf32> to vector<16x64xf32>
    %12 = arith.subf %4, %11 : vector<16x64xf32>
    %13 = arith.mulf %12, %12 : vector<16x64xf32>
    %cst_11 = arith.constant dense<0.000000e+00> : vector<16xf32>
    %14 = vector.multi_reduction <add>, %13, %cst_11 [1] : vector<16x64xf32> to vector<16xf32>
    %15 = vector.shape_cast %14 : vector<16xf32> to vector<16x1xf32>
    %cst_12 = arith.constant 6.400000e+01 : f32
    %16 = vector.broadcast %cst_12 : f32 to vector<16x1xf32>
    %17 = arith.divf %15, %16 : vector<16x1xf32>
    %cst_13 = arith.constant 9.99999996E-13 : f32
    %18 = vector.broadcast %cst_13 : f32 to vector<16x1xf32>
    %19 = arith.addf %17, %18 : vector<16x1xf32>
    %20 = math.rsqrt %19 : vector<16x1xf32>
    %21 = vector.broadcast %20 : vector<16x1xf32> to vector<16x64xf32>
    %22 = arith.mulf %12, %21 : vector<16x64xf32>
    %23 = vector.broadcast %5 : vector<1x64xf32> to vector<16x64xf32>
    %24 = arith.mulf %22, %23 : vector<16x64xf32>
    %25 = vector.broadcast %6 : vector<1x64xf32> to vector<16x64xf32>
    %26 = arith.addf %24, %25 : vector<16x64xf32>
    %c0_14 = arith.constant 0 : index
    %c0_15 = arith.constant 0 : index
    %27 = vector.load %arg3[%c0_14, %c0_15] : memref<64x64xf32, #tpu.memory_space<vmem>>, vector<64x64xf32>
    %28 = arith.truncf %26 : vector<16x64xf32> to vector<16x64xbf16>
    %c0_16 = arith.constant 0 : index
    %c0_17 = arith.constant 0 : index
    %c0_18 = arith.constant 0 : index
    %29 = vector.load %arg7[%c0_16, %c0_17, %c0_18] : memref<2x64x384xbf16, #tpu.memory_space<vmem>>, vector<1x64x384xbf16>
    %30 = vector.shape_cast %29 : vector<1x64x384xbf16> to vector<64x384xbf16>
    %cst_19 = arith.constant dense<0.000000e+00> : vector<16x384xf32>
    %31 = tpu.matmul %28, %30, %cst_19 {dimension_numbers = #tpu.dot_dimension_numbers<[1], [0], [0], [1], [0, 0, 1, 1], [], []>} : vector<16x64xbf16>, vector<64x384xbf16>, vector<16x384xf32> -> vector<16x384xf32>
    %c0_20 = arith.constant 0 : index
    %c0_21 = arith.constant 0 : index
    %c0_22 = arith.constant 0 : index
    %32 = vector.load %arg8[%c0_20, %c0_21, %c0_22] : memref<2x1x384xf32, #tpu.memory_space<vmem>>, vector<1x1x384xf32>
    %33 = vector.shape_cast %32 : vector<1x1x384xf32> to vector<1x384xf32>
    %34 = vector.broadcast %33 : vector<1x384xf32> to vector<16x384xf32>
    %35 = arith.addf %31, %34 : vector<16x384xf32>
    %36 = vector.extract_strided_slice %35 {offsets = [0, 0], sizes = [16, 64], strides = [1, 1]} : vector<16x384xf32> to vector<16x64xf32>
    %37 = vector.extract_strided_slice %36 {offsets = [0, 0], sizes = [16, 16], strides = [1, 1]} : vector<16x64xf32> to vector<16x16xf32>
    %38 = vector.extract_strided_slice %36 {offsets = [0, 16], sizes = [16, 16], strides = [1, 1]} : vector<16x64xf32> to vector<16x16xf32>
    %39 = vector.extract_strided_slice %36 {offsets = [0, 32], sizes = [16, 16], strides = [1, 1]} : vector<16x64xf32> to vector<16x16xf32>
    %40 = vector.extract_strided_slice %36 {offsets = [0, 48], sizes = [16, 16], strides = [1, 1]} : vector<16x64xf32> to vector<16x16xf32>
    %41 = tpu.concatenate %37, %38, %39, %40 in 0 : vector<16x16xf32>, vector<16x16xf32>, vector<16x16xf32>, vector<16x16xf32> -> vector<64x16xf32>
    %42 = arith.truncf %41 : vector<64x16xf32> to vector<64x16xbf16>
    %43 = vector.extract_strided_slice %35 {offsets = [0, 64], sizes = [16, 64], strides = [1, 1]} : vector<16x384xf32> to vector<16x64xf32>
    %44 = vector.extract_strided_slice %43 {offsets = [0, 0], sizes = [16, 16], strides = [1, 1]} : vector<16x64xf32> to vector<16x16xf32>
    %45 = vector.extract_strided_slice %43 {offsets = [0, 16], sizes = [16, 16], strides = [1, 1]} : vector<16x64xf32> to vector<16x16xf32>
    %46 = vector.extract_strided_slice %43 {offsets = [0, 32], sizes = [16, 16], strides = [1, 1]} : vector<16x64xf32> to vector<16x16xf32>
    %47 = vector.extract_strided_slice %43 {offsets = [0, 48], sizes = [16, 16], strides = [1, 1]} : vector<16x64xf32> to vector<16x16xf32>
    %48 = tpu.concatenate %44, %45, %46, %47 in 0 : vector<16x16xf32>, vector<16x16xf32>, vector<16x16xf32>, vector<16x16xf32> -> vector<64x16xf32>
    %49 = arith.truncf %48 : vector<64x16xf32> to vector<64x16xbf16>
    %50 = vector.extract_strided_slice %35 {offsets = [0, 128], sizes = [16, 64], strides = [1, 1]} : vector<16x384xf32> to vector<16x64xf32>
    %51 = vector.extract_strided_slice %35 {offsets = [0, 192], sizes = [16, 64], strides = [1, 1]} : vector<16x384xf32> to vector<16x64xf32>
    %52 = vector.extract_strided_slice %35 {offsets = [0, 256], sizes = [16, 64], strides = [1, 1]} : vector<16x384xf32> to vector<16x64xf32>
    %53 = vector.extract_strided_slice %35 {offsets = [0, 320], sizes = [16, 64], strides = [1, 1]} : vector<16x384xf32> to vector<16x64xf32>
    %54 = tpu.concatenate %50, %51, %52, %53 in 0 : vector<16x64xf32>, vector<16x64xf32>, vector<16x64xf32>, vector<16x64xf32> -> vector<64x64xf32>
    %55 = arith.truncf %54 : vector<64x64xf32> to vector<64x64xbf16>
    %cst_23 = arith.constant dense<0.000000e+00> : vector<64x64xf32>
    %56 = tpu.matmul %42, %49, %cst_23 {dimension_numbers = #tpu.dot_dimension_numbers<[1], [1], [0], [0], [0, 0, 1, 0], [], []>} : vector<64x16xbf16>, vector<64x16xbf16>, vector<64x64xf32> -> vector<64x64xf32>
    %57 = arith.addf %56, %27 : vector<64x64xf32>
    %cst_24 = arith.constant dense<0xFF800000> : vector<64xf32>
    %58 = vector.multi_reduction <maximumf>, %57, %cst_24 [1] : vector<64x64xf32> to vector<64xf32>
    %59 = vector.shape_cast %58 : vector<64xf32> to vector<64x1xf32>
    %60 = vector.broadcast %59 : vector<64x1xf32> to vector<64x64xf32>
    %61 = arith.subf %57, %60 : vector<64x64xf32>
    %62 = math.exp %61 : vector<64x64xf32>
    %cst_25 = arith.constant dense<0.000000e+00> : vector<64xf32>
    %63 = vector.multi_reduction <add>, %62, %cst_25 [1] : vector<64x64xf32> to vector<64xf32>
    %64 = vector.shape_cast %63 : vector<64xf32> to vector<64x1xf32>
    %65 = tpu.reciprocal %64 {approx = true} : vector<64x1xf32> -> vector<64x1xf32>
    %66 = vector.broadcast %65 : vector<64x1xf32> to vector<64x64xf32>
    %67 = arith.mulf %62, %66 : vector<64x64xf32>
    %68 = arith.truncf %67 : vector<64x64xf32> to vector<64x64xbf16>
    %cst_26 = arith.constant dense<0.000000e+00> : vector<64x64xf32>
    %69 = tpu.matmul %68, %55, %cst_26 {dimension_numbers = #tpu.dot_dimension_numbers<[1], [0], [0], [1], [0, 0, 1, 1], [], []>} : vector<64x64xbf16>, vector<64x64xbf16>, vector<64x64xf32> -> vector<64x64xf32>
    %c0_27 = arith.constant 0 : index
    %c0_28 = arith.constant 0 : index
    %c0_29 = arith.constant 0 : index
    %70 = vector.load %arg9[%c0_27, %c0_28, %c0_29] : memref<2x1x64xf32, #tpu.memory_space<vmem>>, vector<1x1x64xf32>
    %71 = vector.shape_cast %70 : vector<1x1x64xf32> to vector<1x64xf32>
    %72 = vector.extract_strided_slice %69 {offsets = [0, 0], sizes = [16, 64], strides = [1, 1]} : vector<64x64xf32> to vector<16x64xf32>
    %73 = vector.broadcast %71 : vector<1x64xf32> to vector<16x64xf32>
    %74 = arith.addf %73, %72 : vector<16x64xf32>
    %75 = vector.extract_strided_slice %69 {offsets = [16, 0], sizes = [16, 64], strides = [1, 1]} : vector<64x64xf32> to vector<16x64xf32>
    %76 = arith.addf %74, %75 : vector<16x64xf32>
    %77 = vector.extract_strided_slice %69 {offsets = [32, 0], sizes = [16, 64], strides = [1, 1]} : vector<64x64xf32> to vector<16x64xf32>
    %78 = arith.addf %76, %77 : vector<16x64xf32>
    %79 = vector.extract_strided_slice %69 {offsets = [48, 0], sizes = [16, 64], strides = [1, 1]} : vector<64x64xf32> to vector<16x64xf32>
    %80 = arith.addf %78, %79 : vector<16x64xf32>
    %81 = arith.addf %26, %80 : vector<16x64xf32>
    %c0_30 = arith.constant 0 : index
    %c0_31 = arith.constant 0 : index
    %c0_32 = arith.constant 0 : index
    %82 = vector.load %arg10[%c0_30, %c0_31, %c0_32] : memref<2x1x64xf32, #tpu.memory_space<vmem>>, vector<1x1x64xf32>
    %83 = vector.shape_cast %82 : vector<1x1x64xf32> to vector<1x64xf32>
    %c0_33 = arith.constant 0 : index
    %c0_34 = arith.constant 0 : index
    %c0_35 = arith.constant 0 : index
    %84 = vector.load %arg11[%c0_33, %c0_34, %c0_35] : memref<2x1x64xf32, #tpu.memory_space<vmem>>, vector<1x1x64xf32>
    %85 = vector.shape_cast %84 : vector<1x1x64xf32> to vector<1x64xf32>
    %cst_36 = arith.constant dense<0.000000e+00> : vector<16xf32>
    %86 = vector.multi_reduction <add>, %81, %cst_36 [1] : vector<16x64xf32> to vector<16xf32>
    %87 = vector.shape_cast %86 : vector<16xf32> to vector<16x1xf32>
    %cst_37 = arith.constant 6.400000e+01 : f32
    %88 = vector.broadcast %cst_37 : f32 to vector<16x1xf32>
    %89 = arith.divf %87, %88 : vector<16x1xf32>
    %90 = vector.broadcast %89 : vector<16x1xf32> to vector<16x64xf32>
    %91 = arith.subf %81, %90 : vector<16x64xf32>
    %92 = arith.mulf %91, %91 : vector<16x64xf32>
    %cst_38 = arith.constant dense<0.000000e+00> : vector<16xf32>
    %93 = vector.multi_reduction <add>, %92, %cst_38 [1] : vector<16x64xf32> to vector<16xf32>
    %94 = vector.shape_cast %93 : vector<16xf32> to vector<16x1xf32>
    %cst_39 = arith.constant 6.400000e+01 : f32
    %95 = vector.broadcast %cst_39 : f32 to vector<16x1xf32>
    %96 = arith.divf %94, %95 : vector<16x1xf32>
    %cst_40 = arith.constant 9.99999996E-13 : f32
    %97 = vector.broadcast %cst_40 : f32 to vector<16x1xf32>
    %98 = arith.addf %96, %97 : vector<16x1xf32>
    %99 = math.rsqrt %98 : vector<16x1xf32>
    %100 = vector.broadcast %99 : vector<16x1xf32> to vector<16x64xf32>
    %101 = arith.mulf %91, %100 : vector<16x64xf32>
    %102 = vector.broadcast %83 : vector<1x64xf32> to vector<16x64xf32>
    %103 = arith.mulf %101, %102 : vector<16x64xf32>
    %104 = vector.broadcast %85 : vector<1x64xf32> to vector<16x64xf32>
    %105 = arith.addf %103, %104 : vector<16x64xf32>
    %106 = arith.truncf %105 : vector<16x64xf32> to vector<16x64xbf16>
    %c0_41 = arith.constant 0 : index
    %c0_42 = arith.constant 0 : index
    %c0_43 = arith.constant 0 : index
    %107 = vector.load %arg12[%c0_41, %c0_42, %c0_43] : memref<2x64x128xbf16, #tpu.memory_space<vmem>>, vector<1x64x128xbf16>
    %108 = vector.shape_cast %107 : vector<1x64x128xbf16> to vector<64x128xbf16>
    %cst_44 = arith.constant dense<0.000000e+00> : vector<16x128xf32>
    %109 = tpu.matmul %106, %108, %cst_44 {dimension_numbers = #tpu.dot_dimension_numbers<[1], [0], [0], [1], [0, 0, 1, 1], [], []>} : vector<16x64xbf16>, vector<64x128xbf16>, vector<16x128xf32> -> vector<16x128xf32>
    %c0_45 = arith.constant 0 : index
    %c0_46 = arith.constant 0 : index
    %c0_47 = arith.constant 0 : index
    %110 = vector.load %arg13[%c0_45, %c0_46, %c0_47] : memref<2x1x128xf32, #tpu.memory_space<vmem>>, vector<1x1x128xf32>
    %111 = vector.shape_cast %110 : vector<1x1x128xf32> to vector<1x128xf32>
    %112 = vector.broadcast %111 : vector<1x128xf32> to vector<16x128xf32>
    %113 = arith.addf %109, %112 : vector<16x128xf32>
    %114 = arith.mulf %113, %113 : vector<16x128xf32>
    %115 = arith.mulf %113, %114 : vector<16x128xf32>
    %cst_48 = arith.constant 4.471500e-02 : f32
    %116 = vector.broadcast %cst_48 : f32 to vector<16x128xf32>
    %117 = arith.mulf %116, %115 : vector<16x128xf32>
    %118 = arith.addf %113, %117 : vector<16x128xf32>
    %cst_49 = arith.constant 0.797884583 : f32
    %119 = vector.broadcast %cst_49 : f32 to vector<16x128xf32>
    %120 = arith.mulf %119, %118 : vector<16x128xf32>
    %121 = math.tanh %120 : vector<16x128xf32>
    %cst_50 = arith.constant 1.000000e+00 : f32
    %122 = vector.broadcast %cst_50 : f32 to vector<16x128xf32>
    %123 = arith.addf %122, %121 : vector<16x128xf32>
    %cst_51 = arith.constant 5.000000e-01 : f32
    %124 = vector.broadcast %cst_51 : f32 to vector<16x128xf32>
    %125 = arith.mulf %124, %123 : vector<16x128xf32>
    %126 = arith.mulf %113, %125 : vector<16x128xf32>
    %127 = arith.truncf %126 : vector<16x128xf32> to vector<16x128xbf16>
    %c0_52 = arith.constant 0 : index
    %c0_53 = arith.constant 0 : index
    %c0_54 = arith.constant 0 : index
    %128 = vector.load %arg14[%c0_52, %c0_53, %c0_54] : memref<2x128x64xbf16, #tpu.memory_space<vmem>>, vector<1x128x64xbf16>
    %129 = vector.shape_cast %128 : vector<1x128x64xbf16> to vector<128x64xbf16>
    %cst_55 = arith.constant dense<0.000000e+00> : vector<16x64xf32>
    %130 = tpu.matmul %127, %129, %cst_55 {dimension_numbers = #tpu.dot_dimension_numbers<[1], [0], [0], [1], [0, 0, 1, 1], [], []>} : vector<16x128xbf16>, vector<128x64xbf16>, vector<16x64xf32> -> vector<16x64xf32>
    %c0_56 = arith.constant 0 : index
    %c0_57 = arith.constant 0 : index
    %c0_58 = arith.constant 0 : index
    %131 = vector.load %arg15[%c0_56, %c0_57, %c0_58] : memref<2x1x64xf32, #tpu.memory_space<vmem>>, vector<1x1x64xf32>
    %132 = vector.shape_cast %131 : vector<1x1x64xf32> to vector<1x64xf32>
    %133 = vector.broadcast %132 : vector<1x64xf32> to vector<16x64xf32>
    %134 = arith.addf %130, %133 : vector<16x64xf32>
    %135 = arith.addf %105, %134 : vector<16x64xf32>
    %c0_59 = arith.constant 0 : index
    %c0_60 = arith.constant 0 : index
    %c0_61 = arith.constant 0 : index
    %136 = vector.load %arg16[%c0_59, %c0_60, %c0_61] : memref<2x1x64xf32, #tpu.memory_space<vmem>>, vector<1x1x64xf32>
    %137 = vector.shape_cast %136 : vector<1x1x64xf32> to vector<1x64xf32>
    %c0_62 = arith.constant 0 : index
    %c0_63 = arith.constant 0 : index
    %c0_64 = arith.constant 0 : index
    %138 = vector.load %arg17[%c0_62, %c0_63, %c0_64] : memref<2x1x64xf32, #tpu.memory_space<vmem>>, vector<1x1x64xf32>
    %139 = vector.shape_cast %138 : vector<1x1x64xf32> to vector<1x64xf32>
    %cst_65 = arith.constant dense<0.000000e+00> : vector<16xf32>
    %140 = vector.multi_reduction <add>, %135, %cst_65 [1] : vector<16x64xf32> to vector<16xf32>
    %141 = vector.shape_cast %140 : vector<16xf32> to vector<16x1xf32>
    %cst_66 = arith.constant 6.400000e+01 : f32
    %142 = vector.broadcast %cst_66 : f32 to vector<16x1xf32>
    %143 = arith.divf %141, %142 : vector<16x1xf32>
    %144 = vector.broadcast %143 : vector<16x1xf32> to vector<16x64xf32>
    %145 = arith.subf %135, %144 : vector<16x64xf32>
    %146 = arith.mulf %145, %145 : vector<16x64xf32>
    %cst_67 = arith.constant dense<0.000000e+00> : vector<16xf32>
    %147 = vector.multi_reduction <add>, %146, %cst_67 [1] : vector<16x64xf32> to vector<16xf32>
    %148 = vector.shape_cast %147 : vector<16xf32> to vector<16x1xf32>
    %cst_68 = arith.constant 6.400000e+01 : f32
    %149 = vector.broadcast %cst_68 : f32 to vector<16x1xf32>
    %150 = arith.divf %148, %149 : vector<16x1xf32>
    %cst_69 = arith.constant 9.99999996E-13 : f32
    %151 = vector.broadcast %cst_69 : f32 to vector<16x1xf32>
    %152 = arith.addf %150, %151 : vector<16x1xf32>
    %153 = math.rsqrt %152 : vector<16x1xf32>
    %154 = vector.broadcast %153 : vector<16x1xf32> to vector<16x64xf32>
    %155 = arith.mulf %145, %154 : vector<16x64xf32>
    %156 = vector.broadcast %137 : vector<1x64xf32> to vector<16x64xf32>
    %157 = arith.mulf %155, %156 : vector<16x64xf32>
    %158 = vector.broadcast %139 : vector<1x64xf32> to vector<16x64xf32>
    %159 = arith.addf %157, %158 : vector<16x64xf32>
    %160 = arith.truncf %159 : vector<16x64xf32> to vector<16x64xbf16>
    %c1 = arith.constant 1 : index
    %c0_70 = arith.constant 0 : index
    %c0_71 = arith.constant 0 : index
    %161 = vector.load %arg7[%c1, %c0_70, %c0_71] : memref<2x64x384xbf16, #tpu.memory_space<vmem>>, vector<1x64x384xbf16>
    %162 = vector.shape_cast %161 : vector<1x64x384xbf16> to vector<64x384xbf16>
    %cst_72 = arith.constant dense<0.000000e+00> : vector<16x384xf32>
    %163 = tpu.matmul %160, %162, %cst_72 {dimension_numbers = #tpu.dot_dimension_numbers<[1], [0], [0], [1], [0, 0, 1, 1], [], []>} : vector<16x64xbf16>, vector<64x384xbf16>, vector<16x384xf32> -> vector<16x384xf32>
    %c1_73 = arith.constant 1 : index
    %c0_74 = arith.constant 0 : index
    %c0_75 = arith.constant 0 : index
    %164 = vector.load %arg8[%c1_73, %c0_74, %c0_75] : memref<2x1x384xf32, #tpu.memory_space<vmem>>, vector<1x1x384xf32>
    %165 = vector.shape_cast %164 : vector<1x1x384xf32> to vector<1x384xf32>
    %166 = vector.broadcast %165 : vector<1x384xf32> to vector<16x384xf32>
    %167 = arith.addf %163, %166 : vector<16x384xf32>
    %168 = vector.extract_strided_slice %167 {offsets = [0, 0], sizes = [16, 64], strides = [1, 1]} : vector<16x384xf32> to vector<16x64xf32>
    %169 = vector.extract_strided_slice %168 {offsets = [0, 0], sizes = [16, 16], strides = [1, 1]} : vector<16x64xf32> to vector<16x16xf32>
    %170 = vector.extract_strided_slice %168 {offsets = [0, 16], sizes = [16, 16], strides = [1, 1]} : vector<16x64xf32> to vector<16x16xf32>
    %171 = vector.extract_strided_slice %168 {offsets = [0, 32], sizes = [16, 16], strides = [1, 1]} : vector<16x64xf32> to vector<16x16xf32>
    %172 = vector.extract_strided_slice %168 {offsets = [0, 48], sizes = [16, 16], strides = [1, 1]} : vector<16x64xf32> to vector<16x16xf32>
    %173 = tpu.concatenate %169, %170, %171, %172 in 0 : vector<16x16xf32>, vector<16x16xf32>, vector<16x16xf32>, vector<16x16xf32> -> vector<64x16xf32>
    %174 = arith.truncf %173 : vector<64x16xf32> to vector<64x16xbf16>
    %175 = vector.extract_strided_slice %167 {offsets = [0, 64], sizes = [16, 64], strides = [1, 1]} : vector<16x384xf32> to vector<16x64xf32>
    %176 = vector.extract_strided_slice %175 {offsets = [0, 0], sizes = [16, 16], strides = [1, 1]} : vector<16x64xf32> to vector<16x16xf32>
    %177 = vector.extract_strided_slice %175 {offsets = [0, 16], sizes = [16, 16], strides = [1, 1]} : vector<16x64xf32> to vector<16x16xf32>
    %178 = vector.extract_strided_slice %175 {offsets = [0, 32], sizes = [16, 16], strides = [1, 1]} : vector<16x64xf32> to vector<16x16xf32>
    %179 = vector.extract_strided_slice %175 {offsets = [0, 48], sizes = [16, 16], strides = [1, 1]} : vector<16x64xf32> to vector<16x16xf32>
    %180 = tpu.concatenate %176, %177, %178, %179 in 0 : vector<16x16xf32>, vector<16x16xf32>, vector<16x16xf32>, vector<16x16xf32> -> vector<64x16xf32>
    %181 = arith.truncf %180 : vector<64x16xf32> to vector<64x16xbf16>
    %182 = vector.extract_strided_slice %167 {offsets = [0, 128], sizes = [16, 64], strides = [1, 1]} : vector<16x384xf32> to vector<16x64xf32>
    %183 = vector.extract_strided_slice %167 {offsets = [0, 192], sizes = [16, 64], strides = [1, 1]} : vector<16x384xf32> to vector<16x64xf32>
    %184 = vector.extract_strided_slice %167 {offsets = [0, 256], sizes = [16, 64], strides = [1, 1]} : vector<16x384xf32> to vector<16x64xf32>
    %185 = vector.extract_strided_slice %167 {offsets = [0, 320], sizes = [16, 64], strides = [1, 1]} : vector<16x384xf32> to vector<16x64xf32>
    %186 = tpu.concatenate %182, %183, %184, %185 in 0 : vector<16x64xf32>, vector<16x64xf32>, vector<16x64xf32>, vector<16x64xf32> -> vector<64x64xf32>
    %187 = arith.truncf %186 : vector<64x64xf32> to vector<64x64xbf16>
    %cst_76 = arith.constant dense<0.000000e+00> : vector<64x64xf32>
    %188 = tpu.matmul %174, %181, %cst_76 {dimension_numbers = #tpu.dot_dimension_numbers<[1], [1], [0], [0], [0, 0, 1, 0], [], []>} : vector<64x16xbf16>, vector<64x16xbf16>, vector<64x64xf32> -> vector<64x64xf32>
    %189 = arith.addf %188, %27 : vector<64x64xf32>
    %cst_77 = arith.constant dense<0xFF800000> : vector<64xf32>
    %190 = vector.multi_reduction <maximumf>, %189, %cst_77 [1] : vector<64x64xf32> to vector<64xf32>
    %191 = vector.shape_cast %190 : vector<64xf32> to vector<64x1xf32>
    %192 = vector.broadcast %191 : vector<64x1xf32> to vector<64x64xf32>
    %193 = arith.subf %189, %192 : vector<64x64xf32>
    %194 = math.exp %193 : vector<64x64xf32>
    %cst_78 = arith.constant dense<0.000000e+00> : vector<64xf32>
    %195 = vector.multi_reduction <add>, %194, %cst_78 [1] : vector<64x64xf32> to vector<64xf32>
    %196 = vector.shape_cast %195 : vector<64xf32> to vector<64x1xf32>
    %197 = tpu.reciprocal %196 {approx = true} : vector<64x1xf32> -> vector<64x1xf32>
    %198 = vector.broadcast %197 : vector<64x1xf32> to vector<64x64xf32>
    %199 = arith.mulf %194, %198 : vector<64x64xf32>
    %200 = arith.truncf %199 : vector<64x64xf32> to vector<64x64xbf16>
    %cst_79 = arith.constant dense<0.000000e+00> : vector<64x64xf32>
    %201 = tpu.matmul %200, %187, %cst_79 {dimension_numbers = #tpu.dot_dimension_numbers<[1], [0], [0], [1], [0, 0, 1, 1], [], []>} : vector<64x64xbf16>, vector<64x64xbf16>, vector<64x64xf32> -> vector<64x64xf32>
    %c1_80 = arith.constant 1 : index
    %c0_81 = arith.constant 0 : index
    %c0_82 = arith.constant 0 : index
    %202 = vector.load %arg9[%c1_80, %c0_81, %c0_82] : memref<2x1x64xf32, #tpu.memory_space<vmem>>, vector<1x1x64xf32>
    %203 = vector.shape_cast %202 : vector<1x1x64xf32> to vector<1x64xf32>
    %204 = vector.extract_strided_slice %201 {offsets = [0, 0], sizes = [16, 64], strides = [1, 1]} : vector<64x64xf32> to vector<16x64xf32>
    %205 = vector.broadcast %203 : vector<1x64xf32> to vector<16x64xf32>
    %206 = arith.addf %205, %204 : vector<16x64xf32>
    %207 = vector.extract_strided_slice %201 {offsets = [16, 0], sizes = [16, 64], strides = [1, 1]} : vector<64x64xf32> to vector<16x64xf32>
    %208 = arith.addf %206, %207 : vector<16x64xf32>
    %209 = vector.extract_strided_slice %201 {offsets = [32, 0], sizes = [16, 64], strides = [1, 1]} : vector<64x64xf32> to vector<16x64xf32>
    %210 = arith.addf %208, %209 : vector<16x64xf32>
    %211 = vector.extract_strided_slice %201 {offsets = [48, 0], sizes = [16, 64], strides = [1, 1]} : vector<64x64xf32> to vector<16x64xf32>
    %212 = arith.addf %210, %211 : vector<16x64xf32>
    %213 = arith.addf %159, %212 : vector<16x64xf32>
    %c1_83 = arith.constant 1 : index
    %c0_84 = arith.constant 0 : index
    %c0_85 = arith.constant 0 : index
    %214 = vector.load %arg10[%c1_83, %c0_84, %c0_85] : memref<2x1x64xf32, #tpu.memory_space<vmem>>, vector<1x1x64xf32>
    %215 = vector.shape_cast %214 : vector<1x1x64xf32> to vector<1x64xf32>
    %c1_86 = arith.constant 1 : index
    %c0_87 = arith.constant 0 : index
    %c0_88 = arith.constant 0 : index
    %216 = vector.load %arg11[%c1_86, %c0_87, %c0_88] : memref<2x1x64xf32, #tpu.memory_space<vmem>>, vector<1x1x64xf32>
    %217 = vector.shape_cast %216 : vector<1x1x64xf32> to vector<1x64xf32>
    %cst_89 = arith.constant dense<0.000000e+00> : vector<16xf32>
    %218 = vector.multi_reduction <add>, %213, %cst_89 [1] : vector<16x64xf32> to vector<16xf32>
    %219 = vector.shape_cast %218 : vector<16xf32> to vector<16x1xf32>
    %cst_90 = arith.constant 6.400000e+01 : f32
    %220 = vector.broadcast %cst_90 : f32 to vector<16x1xf32>
    %221 = arith.divf %219, %220 : vector<16x1xf32>
    %222 = vector.broadcast %221 : vector<16x1xf32> to vector<16x64xf32>
    %223 = arith.subf %213, %222 : vector<16x64xf32>
    %224 = arith.mulf %223, %223 : vector<16x64xf32>
    %cst_91 = arith.constant dense<0.000000e+00> : vector<16xf32>
    %225 = vector.multi_reduction <add>, %224, %cst_91 [1] : vector<16x64xf32> to vector<16xf32>
    %226 = vector.shape_cast %225 : vector<16xf32> to vector<16x1xf32>
    %cst_92 = arith.constant 6.400000e+01 : f32
    %227 = vector.broadcast %cst_92 : f32 to vector<16x1xf32>
    %228 = arith.divf %226, %227 : vector<16x1xf32>
    %cst_93 = arith.constant 9.99999996E-13 : f32
    %229 = vector.broadcast %cst_93 : f32 to vector<16x1xf32>
    %230 = arith.addf %228, %229 : vector<16x1xf32>
    %231 = math.rsqrt %230 : vector<16x1xf32>
    %232 = vector.broadcast %231 : vector<16x1xf32> to vector<16x64xf32>
    %233 = arith.mulf %223, %232 : vector<16x64xf32>
    %234 = vector.broadcast %215 : vector<1x64xf32> to vector<16x64xf32>
    %235 = arith.mulf %233, %234 : vector<16x64xf32>
    %236 = vector.broadcast %217 : vector<1x64xf32> to vector<16x64xf32>
    %237 = arith.addf %235, %236 : vector<16x64xf32>
    %238 = arith.truncf %237 : vector<16x64xf32> to vector<16x64xbf16>
    %c1_94 = arith.constant 1 : index
    %c0_95 = arith.constant 0 : index
    %c0_96 = arith.constant 0 : index
    %239 = vector.load %arg12[%c1_94, %c0_95, %c0_96] : memref<2x64x128xbf16, #tpu.memory_space<vmem>>, vector<1x64x128xbf16>
    %240 = vector.shape_cast %239 : vector<1x64x128xbf16> to vector<64x128xbf16>
    %cst_97 = arith.constant dense<0.000000e+00> : vector<16x128xf32>
    %241 = tpu.matmul %238, %240, %cst_97 {dimension_numbers = #tpu.dot_dimension_numbers<[1], [0], [0], [1], [0, 0, 1, 1], [], []>} : vector<16x64xbf16>, vector<64x128xbf16>, vector<16x128xf32> -> vector<16x128xf32>
    %c1_98 = arith.constant 1 : index
    %c0_99 = arith.constant 0 : index
    %c0_100 = arith.constant 0 : index
    %242 = vector.load %arg13[%c1_98, %c0_99, %c0_100] : memref<2x1x128xf32, #tpu.memory_space<vmem>>, vector<1x1x128xf32>
    %243 = vector.shape_cast %242 : vector<1x1x128xf32> to vector<1x128xf32>
    %244 = vector.broadcast %243 : vector<1x128xf32> to vector<16x128xf32>
    %245 = arith.addf %241, %244 : vector<16x128xf32>
    %246 = arith.mulf %245, %245 : vector<16x128xf32>
    %247 = arith.mulf %245, %246 : vector<16x128xf32>
    %cst_101 = arith.constant 4.471500e-02 : f32
    %248 = vector.broadcast %cst_101 : f32 to vector<16x128xf32>
    %249 = arith.mulf %248, %247 : vector<16x128xf32>
    %250 = arith.addf %245, %249 : vector<16x128xf32>
    %cst_102 = arith.constant 0.797884583 : f32
    %251 = vector.broadcast %cst_102 : f32 to vector<16x128xf32>
    %252 = arith.mulf %251, %250 : vector<16x128xf32>
    %253 = math.tanh %252 : vector<16x128xf32>
    %cst_103 = arith.constant 1.000000e+00 : f32
    %254 = vector.broadcast %cst_103 : f32 to vector<16x128xf32>
    %255 = arith.addf %254, %253 : vector<16x128xf32>
    %cst_104 = arith.constant 5.000000e-01 : f32
    %256 = vector.broadcast %cst_104 : f32 to vector<16x128xf32>
    %257 = arith.mulf %256, %255 : vector<16x128xf32>
    %258 = arith.mulf %245, %257 : vector<16x128xf32>
    %259 = arith.truncf %258 : vector<16x128xf32> to vector<16x128xbf16>
    %c1_105 = arith.constant 1 : index
    %c0_106 = arith.constant 0 : index
    %c0_107 = arith.constant 0 : index
    %260 = vector.load %arg14[%c1_105, %c0_106, %c0_107] : memref<2x128x64xbf16, #tpu.memory_space<vmem>>, vector<1x128x64xbf16>
    %261 = vector.shape_cast %260 : vector<1x128x64xbf16> to vector<128x64xbf16>
    %cst_108 = arith.constant dense<0.000000e+00> : vector<16x64xf32>
    %262 = tpu.matmul %259, %261, %cst_108 {dimension_numbers = #tpu.dot_dimension_numbers<[1], [0], [0], [1], [0, 0, 1, 1], [], []>} : vector<16x128xbf16>, vector<128x64xbf16>, vector<16x64xf32> -> vector<16x64xf32>
    %c1_109 = arith.constant 1 : index
    %c0_110 = arith.constant 0 : index
    %c0_111 = arith.constant 0 : index
    %263 = vector.load %arg15[%c1_109, %c0_110, %c0_111] : memref<2x1x64xf32, #tpu.memory_space<vmem>>, vector<1x1x64xf32>
    %264 = vector.shape_cast %263 : vector<1x1x64xf32> to vector<1x64xf32>
    %265 = vector.broadcast %264 : vector<1x64xf32> to vector<16x64xf32>
    %266 = arith.addf %262, %265 : vector<16x64xf32>
    %267 = arith.addf %237, %266 : vector<16x64xf32>
    %c1_112 = arith.constant 1 : index
    %c0_113 = arith.constant 0 : index
    %c0_114 = arith.constant 0 : index
    %268 = vector.load %arg16[%c1_112, %c0_113, %c0_114] : memref<2x1x64xf32, #tpu.memory_space<vmem>>, vector<1x1x64xf32>
    %269 = vector.shape_cast %268 : vector<1x1x64xf32> to vector<1x64xf32>
    %c1_115 = arith.constant 1 : index
    %c0_116 = arith.constant 0 : index
    %c0_117 = arith.constant 0 : index
    %270 = vector.load %arg17[%c1_115, %c0_116, %c0_117] : memref<2x1x64xf32, #tpu.memory_space<vmem>>, vector<1x1x64xf32>
    %271 = vector.shape_cast %270 : vector<1x1x64xf32> to vector<1x64xf32>
    %cst_118 = arith.constant dense<0.000000e+00> : vector<16xf32>
    %272 = vector.multi_reduction <add>, %267, %cst_118 [1] : vector<16x64xf32> to vector<16xf32>
    %273 = vector.shape_cast %272 : vector<16xf32> to vector<16x1xf32>
    %cst_119 = arith.constant 6.400000e+01 : f32
    %274 = vector.broadcast %cst_119 : f32 to vector<16x1xf32>
    %275 = arith.divf %273, %274 : vector<16x1xf32>
    %276 = vector.broadcast %275 : vector<16x1xf32> to vector<16x64xf32>
    %277 = arith.subf %267, %276 : vector<16x64xf32>
    %278 = arith.mulf %277, %277 : vector<16x64xf32>
    %cst_120 = arith.constant dense<0.000000e+00> : vector<16xf32>
    %279 = vector.multi_reduction <add>, %278, %cst_120 [1] : vector<16x64xf32> to vector<16xf32>
    %280 = vector.shape_cast %279 : vector<16xf32> to vector<16x1xf32>
    %cst_121 = arith.constant 6.400000e+01 : f32
    %281 = vector.broadcast %cst_121 : f32 to vector<16x1xf32>
    %282 = arith.divf %280, %281 : vector<16x1xf32>
    %cst_122 = arith.constant 9.99999996E-13 : f32
    %283 = vector.broadcast %cst_122 : f32 to vector<16x1xf32>
    %284 = arith.addf %282, %283 : vector<16x1xf32>
    %285 = math.rsqrt %284 : vector<16x1xf32>
    %286 = vector.broadcast %285 : vector<16x1xf32> to vector<16x64xf32>
    %287 = arith.mulf %277, %286 : vector<16x64xf32>
    %288 = vector.broadcast %269 : vector<1x64xf32> to vector<16x64xf32>
    %289 = arith.mulf %287, %288 : vector<16x64xf32>
    %290 = vector.broadcast %271 : vector<1x64xf32> to vector<16x64xf32>
    %291 = arith.addf %289, %290 : vector<16x64xf32>
    %292 = vector.extract_strided_slice %291 {offsets = [0, 0], sizes = [1, 64], strides = [1, 1]} : vector<16x64xf32> to vector<1x64xf32>
    %293 = vector.extract_strided_slice %291 {offsets = [8, 0], sizes = [1, 64], strides = [1, 1]} : vector<16x64xf32> to vector<1x64xf32>
    %294 = tpu.concatenate %292, %293 in 0 : vector<1x64xf32>, vector<1x64xf32> -> vector<2x64xf32>
    %295 = arith.truncf %294 : vector<2x64xf32> to vector<2x64xbf16>
    %c0_123 = arith.constant 0 : index
    %c0_124 = arith.constant 0 : index
    %296 = vector.load %arg18[%c0_123, %c0_124] : memref<64x64xbf16, #tpu.memory_space<vmem>>, vector<64x64xbf16>
    %cst_125 = arith.constant dense<0.000000e+00> : vector<2x64xf32>
    %297 = tpu.matmul %295, %296, %cst_125 {dimension_numbers = #tpu.dot_dimension_numbers<[1], [0], [0], [1], [0, 0, 1, 1], [], []>} : vector<2x64xbf16>, vector<64x64xbf16>, vector<2x64xf32> -> vector<2x64xf32>
    %c0_126 = arith.constant 0 : index
    %c0_127 = arith.constant 0 : index
    %298 = vector.load %arg19[%c0_126, %c0_127] : memref<1x64xf32, #tpu.memory_space<vmem>>, vector<1x64xf32>
    %299 = vector.broadcast %298 : vector<1x64xf32> to vector<2x64xf32>
    %300 = arith.addf %297, %299 : vector<2x64xf32>
    %301 = math.tanh %300 : vector<2x64xf32>
    %302 = arith.truncf %301 : vector<2x64xf32> to vector<2x64xbf16>
    %c0_128 = arith.constant 0 : index
    %c0_129 = arith.constant 0 : index
    %303 = vector.load %arg20[%c0_128, %c0_129] : memref<64x128xbf16, #tpu.memory_space<vmem>>, vector<64x128xbf16>
    %cst_130 = arith.constant dense<0.000000e+00> : vector<2x128xf32>
    %304 = tpu.matmul %302, %303, %cst_130 {dimension_numbers = #tpu.dot_dimension_numbers<[1], [0], [0], [1], [0, 0, 1, 1], [], []>} : vector<2x64xbf16>, vector<64x128xbf16>, vector<2x128xf32> -> vector<2x128xf32>
    %c0_131 = arith.constant 0 : index
    %c0_132 = arith.constant 0 : index
    %305 = vector.load %arg21[%c0_131, %c0_132] : memref<1x128xf32, #tpu.memory_space<vmem>>, vector<1x128xf32>
    %306 = vector.broadcast %305 : vector<1x128xf32> to vector<2x128xf32>
    %307 = arith.addf %304, %306 : vector<2x128xf32>
    %cst_133 = arith.constant dense<0xFF800000> : vector<2xf32>
    %308 = vector.multi_reduction <maximumf>, %307, %cst_133 [1] : vector<2x128xf32> to vector<2xf32>
    %309 = vector.shape_cast %308 : vector<2xf32> to vector<2x1xf32>
    %310 = vector.broadcast %309 : vector<2x1xf32> to vector<2x128xf32>
    %311 = arith.subf %307, %310 : vector<2x128xf32>
    %312 = math.exp %311 : vector<2x128xf32>
    %cst_134 = arith.constant dense<0.000000e+00> : vector<2xf32>
    %313 = vector.multi_reduction <add>, %312, %cst_134 [1] : vector<2x128xf32> to vector<2xf32>
    %314 = vector.shape_cast %313 : vector<2xf32> to vector<2x1xf32>
    %315 = vector.broadcast %314 : vector<2x1xf32> to vector<2x128xf32>
    %316 = arith.divf %312, %315 : vector<2x128xf32>
    %c0_135 = arith.constant 0 : index
    %c0_136 = arith.constant 0 : index
    %317 = vector.load %arg22[%c0_135, %c0_136] : memref<2x128xf32, #tpu.memory_space<vmem>>, vector<2x128xf32>
    tpu.vector_store %arg22[%c0_135, %c0_136], %316 {strides = array<i32>} : memref<2x128xf32, #tpu.memory_space<vmem>>, vector<2x128xf32>,
    return
  }
  func.func @transform_0(%arg0: i32) -> (i32, i32) {
    %c0_i32 = arith.constant 0 : i32
    %c0_i32_0 = arith.constant 0 : i32
    %c0_i32_1 = arith.constant 0 : i32
    return %c0_i32, %c0_i32_0 : i32, i32
  }
  func.func @transform_1(%arg0: i32) -> (i32, i32) {
    %c0_i32 = arith.constant 0 : i32
    %c0_i32_0 = arith.constant 0 : i32
    %c0_i32_1 = arith.constant 0 : i32
    return %c0_i32, %c0_i32_0 : i32, i32
  }
  func.func @transform_2(%arg0: i32) -> (i32, i32) {
    %c0_i32 = arith.constant 0 : i32
    %c0_i32_0 = arith.constant 0 : i32
    %c0_i32_1 = arith.constant 0 : i32
    return %c0_i32, %c0_i32_0 : i32, i32
  }
  func.func @transform_3(%arg0: i32) -> (i32, i32) {
    %c0_i32 = arith.constant 0 : i32
    %c0_i32_0 = arith.constant 0 : i32
    %c0_i32_1 = arith.constant 0 : i32
    return %c0_i32, %c0_i32_0 : i32, i32
  }
  func.func @transform_4(%arg0: i32) -> (i32, i32) {
    %c0_i32 = arith.constant 0 : i32
    %c0_i32_0 = arith.constant 0 : i32
    %c0_i32_1 = arith.constant 0 : i32
    return %c0_i32, %c0_i32_0 : i32, i32
  }
  func.func @transform_5(%arg0: i32) -> (i32, i32) {
    %c0_i32 = arith.constant 0 : i32
    %c0_i32_0 = arith.constant 0 : i32
    %c0_i32_1 = arith.constant 0 : i32
    return %c0_i32, %c0_i32_0 : i32, i32
  }
  func.func @transform_6(%arg0: i32) -> (i32, i32, i32) {
    %c0_i32 = arith.constant 0 : i32
    %c0_i32_0 = arith.constant 0 : i32
    %c0_i32_1 = arith.constant 0 : i32
    %c0_i32_2 = arith.constant 0 : i32
    return %c0_i32, %c0_i32_0, %c0_i32_1 : i32, i32, i32
  }
  func.func @transform_7(%arg0: i32) -> (i32, i32, i32) {
    %c0_i32 = arith.constant 0 : i32
    %c0_i32_0 = arith.constant 0 : i32
    %c0_i32_1 = arith.constant 0 : i32
    %c0_i32_2 = arith.constant 0 : i32
    return %c0_i32, %c0_i32_0, %c0_i32_1 : i32, i32, i32
  }
  func.func @transform_8(%arg0: i32) -> (i32, i32, i32) {
    %c0_i32 = arith.constant 0 : i32
    %c0_i32_0 = arith.constant 0 : i32
    %c0_i32_1 = arith.constant 0 : i32
    %c0_i32_2 = arith.constant 0 : i32
    return %c0_i32, %c0_i32_0, %c0_i32_1 : i32, i32, i32
  }
  func.func @transform_9(%arg0: i32) -> (i32, i32, i32) {
    %c0_i32 = arith.constant 0 : i32
    %c0_i32_0 = arith.constant 0 : i32
    %c0_i32_1 = arith.constant 0 : i32
    %c0_i32_2 = arith.constant 0 : i32
    return %c0_i32, %c0_i32_0, %c0_i32_1 : i32, i32, i32
  }
  func.func @transform_10(%arg0: i32) -> (i32, i32, i32) {
    %c0_i32 = arith.constant 0 : i32
    %c0_i32_0 = arith.constant 0 : i32
    %c0_i32_1 = arith.constant 0 : i32
    %c0_i32_2 = arith.constant 0 : i32
    return %c0_i32, %c0_i32_0, %c0_i32_1 : i32, i32, i32
  }
  func.func @transform_11(%arg0: i32) -> (i32, i32, i32) {
    %c0_i32 = arith.constant 0 : i32
    %c0_i32_0 = arith.constant 0 : i32
    %c0_i32_1 = arith.constant 0 : i32
    %c0_i32_2 = arith.constant 0 : i32
    return %c0_i32, %c0_i32_0, %c0_i32_1 : i32, i32, i32
  }
  func.func @transform_12(%arg0: i32) -> (i32, i32, i32) {
    %c0_i32 = arith.constant 0 : i32
    %c0_i32_0 = arith.constant 0 : i32
    %c0_i32_1 = arith.constant 0 : i32
    %c0_i32_2 = arith.constant 0 : i32
    return %c0_i32, %c0_i32_0, %c0_i32_1 : i32, i32, i32
  }
  func.func @transform_13(%arg0: i32) -> (i32, i32, i32) {
    %c0_i32 = arith.constant 0 : i32
    %c0_i32_0 = arith.constant 0 : i32
    %c0_i32_1 = arith.constant 0 : i32
    %c0_i32_2 = arith.constant 0 : i32
    return %c0_i32, %c0_i32_0, %c0_i32_1 : i32, i32, i32
  }
  func.func @transform_14(%arg0: i32) -> (i32, i32, i32) {
    %c0_i32 = arith.constant 0 : i32
    %c0_i32_0 = arith.constant 0 : i32
    %c0_i32_1 = arith.constant 0 : i32
    %c0_i32_2 = arith.constant 0 : i32
    return %c0_i32, %c0_i32_0, %c0_i32_1 : i32, i32, i32
  }
  func.func @transform_15(%arg0: i32) -> (i32, i32, i32) {
    %c0_i32 = arith.constant 0 : i32
    %c0_i32_0 = arith.constant 0 : i32
    %c0_i32_1 = arith.constant 0 : i32
    %c0_i32_2 = arith.constant 0 : i32
    return %c0_i32, %c0_i32_0, %c0_i32_1 : i32, i32, i32
  }
  func.func @transform_16(%arg0: i32) -> (i32, i32, i32) {
    %c0_i32 = arith.constant 0 : i32
    %c0_i32_0 = arith.constant 0 : i32
    %c0_i32_1 = arith.constant 0 : i32
    %c0_i32_2 = arith.constant 0 : i32
    return %c0_i32, %c0_i32_0, %c0_i32_1 : i32, i32, i32
  }
  func.func @transform_17(%arg0: i32) -> (i32, i32) {
    %c0_i32 = arith.constant 0 : i32
    %c0_i32_0 = arith.constant 0 : i32
    %c0_i32_1 = arith.constant 0 : i32
    return %c0_i32, %c0_i32_0 : i32, i32
  }
  func.func @transform_18(%arg0: i32) -> (i32, i32) {
    %c0_i32 = arith.constant 0 : i32
    %c0_i32_0 = arith.constant 0 : i32
    %c0_i32_1 = arith.constant 0 : i32
    return %c0_i32, %c0_i32_0 : i32, i32
  }
  func.func @transform_19(%arg0: i32) -> (i32, i32) {
    %c0_i32 = arith.constant 0 : i32
    %c0_i32_0 = arith.constant 0 : i32
    %c0_i32_1 = arith.constant 0 : i32
    return %c0_i32, %c0_i32_0 : i32, i32
  }
  func.func @transform_20(%arg0: i32) -> (i32, i32) {
    %c0_i32 = arith.constant 0 : i32
    %c0_i32_0 = arith.constant 0 : i32
    %c0_i32_1 = arith.constant 0 : i32
    return %c0_i32, %c0_i32_0 : i32, i32
  }
  func.func @transform_21(%arg0: i32) -> (i32, i32) {
    %c0_i32 = arith.constant 0 : i32
    %c0_i32_0 = arith.constant 0 : i32
    %c0_i32_1 = arith.constant 0 : i32
    return %c0_i32, %c0_i32_0 : i32, i32
  }
}

</mosaic_0001>

<llo_original>
// kernel: tpu_custom_call.1
$region0: #{tpu_custom_call.1}
  #allocation0 [shape = 'u32[]', space=smem, size = 0x4, offset = 0x4, fixed_abs, tag = 'smem constant byte address 0x4 - core index']
  #allocation1 [shape = 'u32[72,128]{1,0:T(1,128)}', space=vmem, size = 0x9000, scoped, tag = 'internal scratch']
  %s0 = inlined_call_operand.vmem [shape: bf16[16,128], index: 0, kind: input, shape index: {}]
  %s1 = inlined_call_operand.hbm [shape: f32[16,64], index: 1, kind: input, shape index: {}]
  %s2 = inlined_call_operand.hbm [shape: f32[64,64], index: 2, kind: input, shape index: {}]
  %s3 = inlined_call_operand.vmem [shape: bf16[128,64], index: 3, kind: input, shape index: {}]
  %s4 = inlined_call_operand.hbm [shape: f32[1,64], index: 4, kind: input, shape index: {}]
  %s5 = inlined_call_operand.hbm [shape: f32[1,64], index: 5, kind: input, shape index: {}]
  %s6 = inlined_call_operand.vmem [shape: bf16[2,64,384], index: 6, kind: input, shape index: {}]
  %s7 = inlined_call_operand.hbm [shape: f32[2,1,384], index: 7, kind: input, shape index: {}]
  %s8 = inlined_call_operand.vmem [shape: f32[2,1,64], index: 8, kind: input, shape index: {}]
  %s9 = inlined_call_operand.vmem [shape: f32[2,1,64], index: 9, kind: input, shape index: {}]
  %s10 = inlined_call_operand.hbm [shape: f32[2,1,64], index: 10, kind: input, shape index: {}]
  %s11 = inlined_call_operand.hbm [shape: bf16[2,64,128], index: 11, kind: input, shape index: {}]
  %s12 = inlined_call_operand.hbm [shape: f32[2,1,128], index: 12, kind: input, shape index: {}]
  %s13 = inlined_call_operand.vmem [shape: bf16[2,128,64], index: 13, kind: input, shape index: {}]
  %s14 = inlined_call_operand.hbm [shape: f32[2,1,64], index: 14, kind: input, shape index: {}]
  %s15 = inlined_call_operand.hbm [shape: f32[2,1,64], index: 15, kind: input, shape index: {}]
  %s16 = inlined_call_operand.vmem [shape: f32[2,1,64], index: 16, kind: input, shape index: {}]
  %s17 = inlined_call_operand.vmem [shape: bf16[64,64], index: 17, kind: input, shape index: {}]
  %s18 = inlined_call_operand.vmem [shape: f32[1,64], index: 18, kind: input, shape index: {}]
  %s19 = inlined_call_operand.hbm [shape: bf16[64,128], index: 19, kind: input, shape index: {}]
  %s20 = inlined_call_operand.vmem [shape: f32[1,128], index: 20, kind: input, shape index: {}]
  %s21 = inlined_call_operand.hbm [shape: f32[2,128], index: 21, kind: output, shape index: {}]
  %s22 = sld [smem:[#allocation0]]
  $region138: #{tpu_custom_call.1} parent=0
    _
  %s24 = ssub.s32 1, %s22
  %s25 = scalar_select 0, %s24, %s22
  $region1: #{tpu_custom_call.1} parent=0
    #allocation2 [shape = 'u8[8192]{0}', space=vmem, size = 0x2000, scoped, tag = 'input window, operand 1, single buffered']
    #allocation3 [shape = 's32[1]{0}', space=sflag, size = 0x4, scoped, tag = 'scoped memory for tpu_custom_call.1']
    #allocation4 [shape = 's32[1]{0}', space=sflag, size = 0x4, scoped, tag = 'scoped memory for tpu_custom_call.1']
    #allocation5 [shape = 'u8[32768]{0}', space=vmem, size = 0x8000, scoped, tag = 'input window, operand 2, single buffered']
    #allocation6 [shape = 's32[1]{0}', space=sflag, size = 0x4, scoped, tag = 'scoped memory for tpu_custom_call.1']
    #allocation7 [shape = 'u8[512]{0}', space=vmem, size = 0x400, scoped, tag = 'input window, operand 4, single buffered']
    #allocation8 [shape = 'u8[512]{0}', space=vmem, size = 0x400, scoped, tag = 'input window, operand 5, single buffered']
    #allocation9 [shape = 's32[1]{0}', space=sflag, size = 0x4, scoped, tag = 'scoped memory for tpu_custom_call.1']
    #allocation10 [shape = 'u8[3072]{0}', space=vmem, size = 0xc00, scoped, tag = 'input window, operand 7, single buffered']
    #allocation11 [shape = 'u8[1024]{0}', space=vmem, size = 0x400, scoped, tag = 'input window, operand 10, single buffered']
    #allocation12 [shape = 's32[1]{0}', space=sflag, size = 0x4, scoped, tag = 'scoped memory for tpu_custom_call.1']
    #allocation13 [shape = 'u8[32768]{0}', space=vmem, size = 0x8000, scoped, tag = 'input window, operand 11, single buffered']
    #allocation14 [shape = 'u8[1024]{0}', space=vmem, size = 0x400, scoped, tag = 'input window, operand 12, single buffered']
    #allocation15 [shape = 's32[1]{0}', space=sflag, size = 0x4, scoped, tag = 'scoped memory for tpu_custom_call.1']
    #allocation16 [shape = 'u8[1024]{0}', space=vmem, size = 0x400, scoped, tag = 'input window, operand 14, single buffered']
    #allocation17 [shape = 'u8[1024]{0}', space=vmem, size = 0x400, scoped, tag = 'input window, operand 15, single buffered']
    #allocation18 [shape = 's32[1]{0}', space=sflag, size = 0x4, scoped, tag = 'scoped memory for tpu_custom_call.1']
    #allocation19 [shape = 'u8[16384]{0}', space=vmem, size = 0x4000, scoped, tag = 'input window, operand 19, single buffered']
    #allocation20 [shape = 'u8[1024]{0}', space=vmem, size = 0x400, scoped, tag = 'output window, operand 0, single buffered']
    %26 = vsyncpa [#allocation3], 0
    %27 = vsyncpa [#allocation6], 0
    %28 = vsyncpa [#allocation9], 0
    %29 = vsyncpa [#allocation12], 0
    %30 = vsyncpa [#allocation15], 0
    %31 = vsyncpa [#allocation18], 0
    %32 = vsyncpa [#allocation4], 0
    // Predicated region
    $region2: #{tpu_custom_call.1} parent=1 // pred_check
      _
    $region3: #{tpu_custom_call.1} parent=1 // pred_check_branch
      %34 = sbr.rel (0) target = $region5
    $region4: #{tpu_custom_call.1} parent=1 // pred_region
      _
    $region5: #{tpu_custom_call.1} parent=1 // pred_fallthru
      _
    // Predicated region
    $region6: #{tpu_custom_call.1} parent=1 // pred_check
      _
    $region7: #{tpu_custom_call.1} parent=1 // pred_check_branch
      %36 = sbr.rel (0) target = $region9
    $region8: #{tpu_custom_call.1} parent=1 // pred_region
      %38 = vsyncadd [#allocation3], 0
      %s39 = sshll.u32 %s1, 4
      %s40 = int_to_ptr.hbm [resolvable:$true] %s39
      %s41 = sshll.u32 [#allocation2], 4
      %s42 = int_to_ptr.vmem [resolvable:$true] %s41
      %47 = dma.hbm_to_vmem [thread:$0]  %s40, 256, %s42, [#allocation3], 128, 128, 8
    $region9: #{tpu_custom_call.1} parent=1 // pred_fallthru
      _
    // Predicated region
    $region10: #{tpu_custom_call.1} parent=1 // pred_check
      _
    $region11: #{tpu_custom_call.1} parent=1 // pred_check_branch
      %49 = sbr.rel (0) target = $region13
    $region12: #{tpu_custom_call.1} parent=1 // pred_region
      %51 = vsyncadd [#allocation6], 0
      %s52 = sshll.u32 %s2, 4
      %s53 = int_to_ptr.hbm [resolvable:$true] %s52
      %s54 = sshll.u32 [#allocation5], 4
      %s55 = int_to_ptr.vmem [resolvable:$true] %s54
      %60 = dma.hbm_to_vmem [thread:$0]  %s53, 1024, %s55, [#allocation6], 128, 128, 8
    $region13: #{tpu_custom_call.1} parent=1 // pred_fallthru
      _
    // Predicated region
    $region14: #{tpu_custom_call.1} parent=1 // pred_check
      _
    $region15: #{tpu_custom_call.1} parent=1 // pred_check_branch
      %62 = sbr.rel (0) target = $region17
    $region16: #{tpu_custom_call.1} parent=1 // pred_region
      _
    $region17: #{tpu_custom_call.1} parent=1 // pred_fallthru
      _
    // Predicated region
    $region18: #{tpu_custom_call.1} parent=1 // pred_check
      _
    $region19: #{tpu_custom_call.1} parent=1 // pred_check_branch
      %64 = sbr.rel (0) target = $region21
    $region20: #{tpu_custom_call.1} parent=1 // pred_region
      %66 = vsyncadd [#allocation6], 0
      %s68 = sshll.u32 %s4, 4
      %s69 = int_to_ptr.hbm [resolvable:$true] %s68
      %s70 = sshll.u32 [#allocation7], 4
      %s71 = int_to_ptr.vmem [resolvable:$true] %s70
      %73 = dma.hbm_to_vmem [thread:$0]  %s69, 16, %s71, [#allocation6]
    $region21: #{tpu_custom_call.1} parent=1 // pred_fallthru
      _
    // Predicated region
    $region22: #{tpu_custom_call.1} parent=1 // pred_check
      _
    $region23: #{tpu_custom_call.1} parent=1 // pred_check_branch
      %75 = sbr.rel (0) target = $region25
    $region24: #{tpu_custom_call.1} parent=1 // pred_region
      %77 = vsyncadd [#allocation9], 0
      %s79 = sshll.u32 %s5, 4
      %s80 = int_to_ptr.hbm [resolvable:$true] %s79
      %s81 = sshll.u32 [#allocation8], 4
      %s82 = int_to_ptr.vmem [resolvable:$true] %s81
      %84 = dma.hbm_to_vmem [thread:$0]  %s80, 16, %s82, [#allocation9]
    $region25: #{tpu_custom_call.1} parent=1 // pred_fallthru
      _
    // Predicated region
    $region26: #{tpu_custom_call.1} parent=1 // pred_check
      _
    $region27: #{tpu_custom_call.1} parent=1 // pred_check_branch
      %86 = sbr.rel (0) target = $region29
    $region28: #{tpu_custom_call.1} parent=1 // pred_region
      _
    $region29: #{tpu_custom_call.1} parent=1 // pred_fallthru
      _
    // Predicated region
    $region30: #{tpu_custom_call.1} parent=1 // pred_check
      _
    $region31: #{tpu_custom_call.1} parent=1 // pred_check_branch
      %88 = sbr.rel (0) target = $region33
    $region32: #{tpu_custom_call.1} parent=1 // pred_region
      %90 = vsyncadd [#allocation9], 0
      %s91 = sshll.u32 %s7, 4
      %s92 = int_to_ptr.hbm [resolvable:$true] %s91
      %s93 = sshll.u32 [#allocation10], 4
      %s94 = int_to_ptr.vmem [resolvable:$true] %s93
      %99 = dma.hbm_to_vmem [thread:$0]  %s92, 96, %s94, [#allocation9], 48, 48, 3
    $region33: #{tpu_custom_call.1} parent=1 // pred_fallthru
      _
    // Predicated region
    $region34: #{tpu_custom_call.1} parent=1 // pred_check
      _
    $region35: #{tpu_custom_call.1} parent=1 // pred_check_branch
      %101 = sbr.rel (0) target = $region37
    $region36: #{tpu_custom_call.1} parent=1 // pred_region
      _
    $region37: #{tpu_custom_call.1} parent=1 // pred_fallthru
      _
    // Predicated region
    $region38: #{tpu_custom_call.1} parent=1 // pred_check
      _
    $region39: #{tpu_custom_call.1} parent=1 // pred_check_branch
      %103 = sbr.rel (0) target = $region41
    $region40: #{tpu_custom_call.1} parent=1 // pred_region
      _
    $region41: #{tpu_custom_call.1} parent=1 // pred_fallthru
      _
    // Predicated region
    $region42: #{tpu_custom_call.1} parent=1 // pred_check
      _
    $region43: #{tpu_custom_call.1} parent=1 // pred_check_branch
      %105 = sbr.rel (0) target = $region45
    $region44: #{tpu_custom_call.1} parent=1 // pred_region
      %107 = vsyncadd [#allocation12], 0
      %s108 = sshll.u32 %s10, 4
      %s109 = int_to_ptr.hbm [resolvable:$true] %s108
      %s110 = sshll.u32 [#allocation11], 4
      %s111 = int_to_ptr.vmem [resolvable:$true] %s110
      %116 = dma.hbm_to_vmem [thread:$0]  %s109, 32, %s111, [#allocation12], 16, 16, 1
    $region45: #{tpu_custom_call.1} parent=1 // pred_fallthru
      _
    // Predicated region
    $region46: #{tpu_custom_call.1} parent=1 // pred_check
      _
    $region47: #{tpu_custom_call.1} parent=1 // pred_check_branch
      %118 = sbr.rel (0) target = $region49
    $region48: #{tpu_custom_call.1} parent=1 // pred_region
      %120 = vsyncadd [#allocation12], 0
      %s121 = sshll.u32 %s11, 4
      %s122 = int_to_ptr.hbm [resolvable:$true] %s121
      %s123 = sshll.u32 [#allocation13], 4
      %s124 = int_to_ptr.vmem [resolvable:$true] %s123
      %129 = dma.hbm_to_vmem [thread:$0]  %s122, 1024, %s124, [#allocation12], 64, 64, 4
    $region49: #{tpu_custom_call.1} parent=1 // pred_fallthru
      _
    // Predicated region
    $region50: #{tpu_custom_call.1} parent=1 // pred_check
      _
    $region51: #{tpu_custom_call.1} parent=1 // pred_check_branch
      %131 = sbr.rel (0) target = $region53
    $region52: #{tpu_custom_call.1} parent=1 // pred_region
      %133 = vsyncadd [#allocation15], 0
      %s134 = sshll.u32 %s12, 4
      %s135 = int_to_ptr.hbm [resolvable:$true] %s134
      %s136 = sshll.u32 [#allocation14], 4
      %s137 = int_to_ptr.vmem [resolvable:$true] %s136
      %142 = dma.hbm_to_vmem [thread:$0]  %s135, 32, %s137, [#allocation15], 16, 16, 1
    $region53: #{tpu_custom_call.1} parent=1 // pred_fallthru
      _
    // Predicated region
    $region54: #{tpu_custom_call.1} parent=1 // pred_check
      _
    $region55: #{tpu_custom_call.1} parent=1 // pred_check_branch
      %144 = sbr.rel (0) target = $region57
    $region56: #{tpu_custom_call.1} parent=1 // pred_region
      _
    $region57: #{tpu_custom_call.1} parent=1 // pred_fallthru
      _
    // Predicated region
    $region58: #{tpu_custom_call.1} parent=1 // pred_check
      _
    $region59: #{tpu_custom_call.1} parent=1 // pred_check_branch
      %146 = sbr.rel (0) target = $region61
    $region60: #{tpu_custom_call.1} parent=1 // pred_region
      %148 = vsyncadd [#allocation15], 0
      %s149 = sshll.u32 %s14, 4
      %s150 = int_to_ptr.hbm [resolvable:$true] %s149
      %s151 = sshll.u32 [#allocation16], 4
      %s152 = int_to_ptr.vmem [resolvable:$true] %s151
      %157 = dma.hbm_to_vmem [thread:$0]  %s150, 32, %s152, [#allocation15], 16, 16, 1
    $region61: #{tpu_custom_call.1} parent=1 // pred_fallthru
      _
    // Predicated region
    $region62: #{tpu_custom_call.1} parent=1 // pred_check
      _
    $region63: #{tpu_custom_call.1} parent=1 // pred_check_branch
      %159 = sbr.rel (0) target = $region65
    $region64: #{tpu_custom_call.1} parent=1 // pred_region
      %161 = vsyncadd [#allocation18], 0
      %s162 = sshll.u32 %s15, 4
      %s163 = int_to_ptr.hbm [resolvable:$true] %s162
      %s164 = sshll.u32 [#allocation17], 4
      %s165 = int_to_ptr.vmem [resolvable:$true] %s164
      %170 = dma.hbm_to_vmem [thread:$0]  %s163, 32, %s165, [#allocation18], 16, 16, 1
    $region65: #{tpu_custom_call.1} parent=1 // pred_fallthru
      _
    // Predicated region
    $region66: #{tpu_custom_call.1} parent=1 // pred_check
      _
    $region67: #{tpu_custom_call.1} parent=1 // pred_check_branch
      %172 = sbr.rel (0) target = $region69
    $region68: #{tpu_custom_call.1} parent=1 // pred_region
      _
    $region69: #{tpu_custom_call.1} parent=1 // pred_fallthru
      _
    // Predicated region
    $region70: #{tpu_custom_call.1} parent=1 // pred_check
      _
    $region71: #{tpu_custom_call.1} parent=1 // pred_check_branch
      %174 = sbr.rel (0) target = $region73
    $region72: #{tpu_custom_call.1} parent=1 // pred_region
      _
    $region73: #{tpu_custom_call.1} parent=1 // pred_fallthru
      _
    // Predicated region
    $region74: #{tpu_custom_call.1} parent=1 // pred_check
      _
    $region75: #{tpu_custom_call.1} parent=1 // pred_check_branch
      %176 = sbr.rel (0) target = $region77
    $region76: #{tpu_custom_call.1} parent=1 // pred_region
      _
    $region77: #{tpu_custom_call.1} parent=1 // pred_fallthru
      _
    // Predicated region
    $region78: #{tpu_custom_call.1} parent=1 // pred_check
      _
    $region79: #{tpu_custom_call.1} parent=1 // pred_check_branch
      %178 = sbr.rel (0) target = $region81
    $region80: #{tpu_custom_call.1} parent=1 // pred_region
      %180 = vsyncadd [#allocation18], 0
      %s181 = sshll.u32 %s19, 4
      %s182 = int_to_ptr.hbm [resolvable:$true] %s181
      %s183 = sshll.u32 [#allocation19], 4
      %s184 = int_to_ptr.vmem [resolvable:$true] %s183
      %189 = dma.hbm_to_vmem [thread:$0]  %s182, 512, %s184, [#allocation18], 64, 64, 4
    $region81: #{tpu_custom_call.1} parent=1 // pred_fallthru
      _
    // Predicated region
    $region82: #{tpu_custom_call.1} parent=1 // pred_check
      _
    $region83: #{tpu_custom_call.1} parent=1 // pred_check_branch
      %191 = sbr.rel (0) target = $region85
    $region84: #{tpu_custom_call.1} parent=1 // pred_region
      _
    $region85: #{tpu_custom_call.1} parent=1 // pred_fallthru
      _
    // Predicated region
    $region86: #{tpu_custom_call.1} parent=1 // pred_check
      _
    $region87: #{tpu_custom_call.1} parent=1 // pred_check_branch
      %193 = sbr.rel (0) target = $region89
    $region88: #{tpu_custom_call.1} parent=1 // pred_region
      %195 = dma.done [#allocation3], 256
    $region89: #{tpu_custom_call.1} parent=1 // pred_fallthru
      _
    // Predicated region
    $region90: #{tpu_custom_call.1} parent=1 // pred_check
      _
    $region91: #{tpu_custom_call.1} parent=1 // pred_check_branch
      %197 = sbr.rel (0) target = $region93
    $region92: #{tpu_custom_call.1} parent=1 // pred_region
      %199 = dma.done [#allocation6], 1024
    $region93: #{tpu_custom_call.1} parent=1 // pred_fallthru
      _
    // Predicated region
    $region94: #{tpu_custom_call.1} parent=1 // pred_check
      _
    $region95: #{tpu_custom_call.1} parent=1 // pred_check_branch
      %201 = sbr.rel (0) target = $region97
    $region96: #{tpu_custom_call.1} parent=1 // pred_region
      %203 = dma.done [#allocation6], 16
    $region97: #{tpu_custom_call.1} parent=1 // pred_fallthru
      _
    // Predicated region
    $region98: #{tpu_custom_call.1} parent=1 // pred_check
      _
    $region99: #{tpu_custom_call.1} parent=1 // pred_check_branch
      %205 = sbr.rel (0) target = $region101
    $region100: #{tpu_custom_call.1} parent=1 // pred_region
      %207 = dma.done [#allocation9], 16
    $region101: #{tpu_custom_call.1} parent=1 // pred_fallthru
      _
    // Predicated region
    $region102: #{tpu_custom_call.1} parent=1 // pred_check
      _
    $region103: #{tpu_custom_call.1} parent=1 // pred_check_branch
      %209 = sbr.rel (0) target = $region105
    $region104: #{tpu_custom_call.1} parent=1 // pred_region
      %211 = dma.done [#allocation9], 96
    $region105: #{tpu_custom_call.1} parent=1 // pred_fallthru
      _
    // Predicated region
    $region106: #{tpu_custom_call.1} parent=1 // pred_check
      _
    $region107: #{tpu_custom_call.1} parent=1 // pred_check_branch
      %213 = sbr.rel (0) target = $region109
    $region108: #{tpu_custom_call.1} parent=1 // pred_region
      %215 = dma.done [#allocation12], 32
    $region109: #{tpu_custom_call.1} parent=1 // pred_fallthru
      _
    // Predicated region
    $region110: #{tpu_custom_call.1} parent=1 // pred_check
      _
    $region111: #{tpu_custom_call.1} parent=1 // pred_check_branch
      %217 = sbr.rel (0) target = $region113
    $region112: #{tpu_custom_call.1} parent=1 // pred_region
      %219 = dma.done [#allocation12], 1024
    $region113: #{tpu_custom_call.1} parent=1 // pred_fallthru
      _
    // Predicated region
    $region114: #{tpu_custom_call.1} parent=1 // pred_check
      _
    $region115: #{tpu_custom_call.1} parent=1 // pred_check_branch
      %221 = sbr.rel (0) target = $region117
    $region116: #{tpu_custom_call.1} parent=1 // pred_region
      %223 = dma.done [#allocation15], 32
    $region117: #{tpu_custom_call.1} parent=1 // pred_fallthru
      _
    // Predicated region
    $region118: #{tpu_custom_call.1} parent=1 // pred_check
      _
    $region119: #{tpu_custom_call.1} parent=1 // pred_check_branch
      %225 = sbr.rel (0) target = $region121
    $region120: #{tpu_custom_call.1} parent=1 // pred_region
      %227 = dma.done [#allocation15], 32
    $region121: #{tpu_custom_call.1} parent=1 // pred_fallthru
      _
    // Predicated region
    $region122: #{tpu_custom_call.1} parent=1 // pred_check
      _
    $region123: #{tpu_custom_call.1} parent=1 // pred_check_branch
      %229 = sbr.rel (0) target = $region125
    $region124: #{tpu_custom_call.1} parent=1 // pred_region
      %231 = dma.done [#allocation18], 32
    $region125: #{tpu_custom_call.1} parent=1 // pred_fallthru
      _
    // Predicated region
    $region126: #{tpu_custom_call.1} parent=1 // pred_check
      _
    $region127: #{tpu_custom_call.1} parent=1 // pred_check_branch
      %233 = sbr.rel (0) target = $region129
    $region128: #{tpu_custom_call.1} parent=1 // pred_region
      %235 = dma.done [#allocation18], 512
    $region129: #{tpu_custom_call.1} parent=1 // pred_fallthru
      _
    %v237 = vld [vmem:[%s0] sm:$0xf]
    %v238 = vld [vmem:[%s0 + $0x4] sm:$0xf]
    %v239 = vld [vmem:[%s3] sm:$0xf]
    %v240 = vld [vmem:[%s3 + $0x4] sm:$0xf]
    %v241 = vld [vmem:[%s3 + $0x8] sm:$0xf]
    %v242 = vld [vmem:[%s3 + $0xc] sm:$0xf]
    %v243 = vld [vmem:[%s3 + $0x10] sm:$0xf]
    %v244 = vld [vmem:[%s3 + $0x14] sm:$0xf]
    %v245 = vld [vmem:[%s3 + $0x18] sm:$0xf]
    %v246 = vld [vmem:[%s3 + $0x1c] sm:$0xf]
    %v247 = vld [vmem:[%s3 + $0x20] sm:$0xf]
    %v248 = vld [vmem:[%s3 + $0x24] sm:$0xf]
    %v249 = vld [vmem:[%s3 + $0x28] sm:$0xf]
    %v250 = vld [vmem:[%s3 + $0x2c] sm:$0xf]
    %v251 = vld [vmem:[%s3 + $0x30] sm:$0xf]
    %v252 = vld [vmem:[%s3 + $0x34] sm:$0xf]
    %v253 = vld [vmem:[%s3 + $0x38] sm:$0xf]
    %v254 = vld [vmem:[%s3 + $0x3c] sm:$0xf]
    %v255 = vld [vmem:[#allocation2] sm:$0xff]
    %v256 = vld [vmem:[#allocation2 + $0x8] sm:$0xff]
    %v259 = vunpack.c.l.b16 %v237
    %v260 = vunpack.c.l.b16 %v238
    %v261 = vpack.c.b16 %v260, %v259
    %v279 = vunpack.c.l.b16 %v239
    %v280 = vunpack.c.l.b16 %v240
    %v281 = vunpack.c.l.b16 %v241
    %v282 = vunpack.c.l.b16 %v242
    %v283 = vunpack.c.l.b16 %v243
    %v284 = vunpack.c.l.b16 %v244
    %v285 = vunpack.c.l.b16 %v245
    %v286 = vunpack.c.l.b16 %v246
    %v287 = vunpack.c.l.b16 %v247
    %v288 = vunpack.c.l.b16 %v248
    %v289 = vunpack.c.l.b16 %v249
    %v290 = vunpack.c.l.b16 %v250
    %v291 = vunpack.c.l.b16 %v251
    %v292 = vunpack.c.l.b16 %v252
    %v293 = vunpack.c.l.b16 %v253
    %v294 = vunpack.c.l.b16 %v254
    %v295 = vpack.c.b16 %v280, %v279
    %v296 = vpack.c.b16 %v282, %v281
    %v297 = vpack.c.b16 %v284, %v283
    %v298 = vpack.c.b16 %v286, %v285
    %v299 = vpack.c.b16 %v288, %v287
    %v300 = vpack.c.b16 %v290, %v289
    %v301 = vpack.c.b16 %v292, %v291
    %v302 = vpack.c.b16 %v294, %v293
    %311 = vmatpush.bf16.msra.mxu0 %v302
    %312 = vmatpush.bf16.msra.mxu0 %v301
    %313 = vmatpush.bf16.msra.mxu0 %v300
    %314 = vmatpush.bf16.msra.mxu0 %v299
    %315 = vmatpush.bf16.msra.mxu0 %v298
    %316 = vmatpush.bf16.msra.mxu0 %v297
    %317 = vmatpush.bf16.msra.mxu0 %v296
    %318 = vmatpush.bf16.msra.mxu0 %v295
    %319 = vmatmul.bf16.gmra.mxu0 %v261
    %v320 = vpop.f32.mrf.mxu0
    %v321 = vadd.f32 %v255, %v320
    %v322 = vpop.f32.mrf.mxu0
    %v323 = vadd.f32 %v256, %v322
    %324 = vdwg.mxu0
    %v325 = vld [vmem:[#allocation7] sm:$0x1]
    %v326 = vld [vmem:[#allocation8] sm:$0x1]
    %vm327 = vcmask 523264
    %v328 = vsel %vm327, %v321, 0.0
    %329 = vadd.xlane.f32.xlu0 %v328
    %v330 = vpop.xlane.xlu0 %329
    %v331 = vsel %vm327, %v323, 0.0
    %332 = vadd.xlane.f32.xlu0 %v331
    %v333 = vpop.xlane.xlu0 %332
    %v334 = vrcp.pop 64.0
    %v335 = vmul.f32 64.0, %v334
    %v336 = vsub.f32 1.0, %v335
    %v337 = vmul.f32 %v334, %v336
    %v338 = vadd.f32 %v334, %v337
    %vm339 = vweird.f32 %v334
    %v340 = vsel %vm339, %v334, %v338
    %v341 = vmul.f32 %v330, %v340
    %v342 = vmul.f32 %v333, %v340
    %v343 = vsub.f32 %v321, %v341
    %v344 = vsub.f32 %v323, %v342
    %v345 = vmul.f32 %v343, %v343
    %v346 = vmul.f32 %v344, %v344
    %v347 = vsel %vm327, %v345, 0.0
    %348 = vadd.xlane.f32.xlu0 %v347
    %v349 = vpop.xlane.xlu0 %348
    %v350 = vsel %vm327, %v346, 0.0
    %351 = vadd.xlane.f32.xlu0 %v350
    %v352 = vpop.xlane.xlu0 %351
    %v353 = vmul.f32 %v349, %v340
    %v354 = vmul.f32 %v352, %v340
    %v355 = vadd.f32 %v353, 1e-12
    %v356 = vadd.f32 %v354, 1e-12
    %v357 = vrsqrt.pop %v355
    %v358 = vmul.f32 %v357, %v355
    %v359 = vmul.f32 %v358, %v357
    %v360 = vmul.f32 0.5, %v359
    %v361 = vsub.f32 1.5, %v360
    %v362 = vmul.f32 %v357, %v361
    %vm363 = vweird.f32 %v355
    %vm364 = vweird.f32 %v357
    %vm365 = vmor %vm363, %vm364
    %v366 = vsel %vm365, %v357, %v362
    %v367 = vrsqrt.pop %v356
    %v368 = vmul.f32 %v367, %v356
    %v369 = vmul.f32 %v368, %v367
    %v370 = vmul.f32 0.5, %v369
    %v371 = vsub.f32 1.5, %v370
    %v372 = vmul.f32 %v367, %v371
    %vm373 = vweird.f32 %v356
    %vm374 = vweird.f32 %v367
    %vm375 = vmor %vm373, %vm374
    %v376 = vsel %vm375, %v367, %v372
    %v377 = vmul.f32 %v343, %v366
    %v378 = vmul.f32 %v344, %v376
    %v380 = vperm.slane %v325, 0
    %v382 = vmul.f32 %v377, %v380
    %v383 = vmul.f32 %v378, %v380
    %v385 = vperm.slane %v326, 0
    %v387 = vadd.f32 %v382, %v385
    %v388 = vadd.f32 %v383, %v385
    %v389 = vld [vmem:[#allocation5] sm:$0xff]
    %v390 = vld [vmem:[#allocation5 + $0x8] sm:$0xff]
    %v391 = vld [vmem:[#allocation5 + $0x10] sm:$0xff]
    %v392 = vld [vmem:[#allocation5 + $0x18] sm:$0xff]
    %v393 = vld [vmem:[#allocation5 + $0x20] sm:$0xff]
    %v394 = vld [vmem:[#allocation5 + $0x28] sm:$0xff]
    %v395 = vld [vmem:[#allocation5 + $0x30] sm:$0xff]
    %v396 = vld [vmem:[#allocation5 + $0x38] sm:$0xff]
    %v397 = vpack.c.bf16 %v388, %v387
    %v398 = vld [vmem:[%s6] sm:$0xff]
    %v399 = vld [vmem:[%s6 + $0x8] sm:$0xf]
    %v400 = vld [vmem:[%s6 + $0xc] sm:$0xff]
    %v401 = vld [vmem:[%s6 + $0x14] sm:$0xf]
    %v402 = vld [vmem:[%s6 + $0x18] sm:$0xff]
    %v403 = vld [vmem:[%s6 + $0x20] sm:$0xf]
    %v404 = vld [vmem:[%s6 + $0x24] sm:$0xff]
    %v405 = vld [vmem:[%s6 + $0x2c] sm:$0xf]
    %v406 = vld [vmem:[%s6 + $0x30] sm:$0xff]
    %v407 = vld [vmem:[%s6 + $0x38] sm:$0xf]
    %v408 = vld [vmem:[%s6 + $0x3c] sm:$0xff]
    %v409 = vld [vmem:[%s6 + $0x44] sm:$0xf]
    %v410 = vld [vmem:[%s6 + $0x48] sm:$0xff]
    %v411 = vld [vmem:[%s6 + $0x50] sm:$0xf]
    %v412 = vld [vmem:[%s6 + $0x54] sm:$0xff]
    %v413 = vld [vmem:[%s6 + $0x5c] sm:$0xf]
    %v414 = vld [vmem:[#allocation10] sm:$0x7]
    %v416 = vperm.slane %v414, 0
    %v417 = vperm.slane %v414, 1
    %v418 = vperm.slane %v414, 2
    %v438 = vunpack.c.l.b16 %v398
    %v439 = vunpack.c.h.b16 %v398
    %v440 = vunpack.c.l.b16 %v399
    %v441 = vunpack.c.l.b16 %v400
    %v442 = vunpack.c.h.b16 %v400
    %v443 = vunpack.c.l.b16 %v401
    %v444 = vunpack.c.l.b16 %v402
    %v445 = vunpack.c.h.b16 %v402
    %v446 = vunpack.c.l.b16 %v403
    %v447 = vunpack.c.l.b16 %v404
    %v448 = vunpack.c.h.b16 %v404
    %v449 = vunpack.c.l.b16 %v405
    %v450 = vunpack.c.l.b16 %v406
    %v451 = vunpack.c.h.b16 %v406
    %v452 = vunpack.c.l.b16 %v407
    %v453 = vunpack.c.l.b16 %v408
    %v454 = vunpack.c.h.b16 %v408
    %v455 = vunpack.c.l.b16 %v409
    %v456 = vunpack.c.l.b16 %v410
    %v457 = vunpack.c.h.b16 %v410
    %v458 = vunpack.c.l.b16 %v411
    %v459 = vunpack.c.l.b16 %v412
    %v460 = vunpack.c.h.b16 %v412
    %v461 = vunpack.c.l.b16 %v413
    %v462 = vpack.c.b16 %v441, %v438
    %v463 = vpack.c.b16 %v442, %v439
    %v464 = vpack.c.b16 %v443, %v440
    %v465 = vpack.c.b16 %v447, %v444
    %v466 = vpack.c.b16 %v448, %v445
    %v467 = vpack.c.b16 %v449, %v446
    %v468 = vpack.c.b16 %v453, %v450
    %v469 = vpack.c.b16 %v454, %v451
    %v470 = vpack.c.b16 %v455, %v452
    %v471 = vpack.c.b16 %v459, %v456
    %v472 = vpack.c.b16 %v460, %v457
    %v473 = vpack.c.b16 %v461, %v458
    %v487 = vsel %vm327, %v397, 0
    %489 = vmatpush.bf16.msra.mxu0 0
    %490 = vmatpush.bf16.msra.mxu0 0
    %491 = vmatpush.bf16.msra.mxu0 0
    %492 = vmatpush.bf16.msra.mxu0 0
    %493 = vmatpush.bf16.msra.mxu0 %v471
    %494 = vmatpush.bf16.msra.mxu0 %v468
    %495 = vmatpush.bf16.msra.mxu0 %v465
    %496 = vmatpush.bf16.msra.mxu0 %v462
    %497 = vmatmul.bf16.gmra.mxu0 %v487
    %v498 = vpop.f32.mrf.mxu0
    %v499 = vadd.f32 %v416, %v498
    %v500 = vpop.f32.mrf.mxu0
    %v501 = vadd.f32 %v416, %v500
    %502 = vdwg.mxu0
    %503 = vmatpush.bf16.msra.mxu0 0
    %504 = vmatpush.bf16.msra.mxu0 0
    %505 = vmatpush.bf16.msra.mxu0 0
    %506 = vmatpush.bf16.msra.mxu0 0
    %507 = vmatpush.bf16.msra.mxu0 %v472
    %508 = vmatpush.bf16.msra.mxu0 %v469
    %509 = vmatpush.bf16.msra.mxu0 %v466
    %510 = vmatpush.bf16.msra.mxu0 %v463
    %511 = vmatmul.bf16.gmra.mxu0 %v487
    %v512 = vpop.f32.mrf.mxu0
    %v513 = vadd.f32 %v417, %v512
    %v514 = vpop.f32.mrf.mxu0
    %v515 = vadd.f32 %v417, %v514
    %516 = vdwg.mxu0
    %517 = vmatpush.bf16.msra.mxu0 0
    %518 = vmatpush.bf16.msra.mxu0 0
    %519 = vmatpush.bf16.msra.mxu0 0
    %520 = vmatpush.bf16.msra.mxu0 0
    %521 = vmatpush.bf16.msra.mxu0 %v473
    %522 = vmatpush.bf16.msra.mxu0 %v470
    %523 = vmatpush.bf16.msra.mxu0 %v467
    %524 = vmatpush.bf16.msra.mxu0 %v464
    %525 = vmatmul.bf16.gmra.mxu0 %v487
    %v526 = vpop.f32.mrf.mxu0
    %v527 = vadd.f32 %v418, %v526
    %v528 = vpop.f32.mrf.mxu0
    %v529 = vadd.f32 %v418, %v528
    %530 = vdwg.mxu0
    %533 = vrot.lane.b32.xlu0 %v499, 112
    %v534 = vpop.permute.xlu0 %533
    %535 = vrot.lane.b32.xlu0 %v501, 112
    %v536 = vpop.permute.xlu0 %535
    %539 = vrot.lane.b32.xlu0 %v499, 96
    %v540 = vpop.permute.xlu0 %539
    %541 = vrot.lane.b32.xlu0 %v501, 96
    %v542 = vpop.permute.xlu0 %541
    %545 = vrot.lane.b32.xlu0 %v499, 80
    %v546 = vpop.permute.xlu0 %545
    %547 = vrot.lane.b32.xlu0 %v501, 80
    %v548 = vpop.permute.xlu0 %547
    %v551 = vpack.c.bf16 %v501, %v499
    %v552 = vpack.c.bf16 %v536, %v534
    %v553 = vpack.c.bf16 %v542, %v540
    %v554 = vpack.c.bf16 %v548, %v546
    %557 = vrot.lane.b32.xlu0 %v513, 64
    %v558 = vpop.permute.xlu0 %557
    %559 = vrot.lane.b32.xlu0 %v515, 64
    %v560 = vpop.permute.xlu0 %559
    %565 = vrot.lane.b32.xlu0 %v527, 64
    %v566 = vpop.permute.xlu0 %565
    %567 = vrot.lane.b32.xlu0 %v529, 64
    %v568 = vpop.permute.xlu0 %567
    %v571 = vpack.c.bf16 %v515, %v513
    %v572 = vpack.c.bf16 %v560, %v558
    %v573 = vpack.c.bf16 %v529, %v527
    %v574 = vpack.c.bf16 %v568, %v566
    %579 = vrot.lane.b32.xlu0 %v551, 64
    %v580 = vpop.permute.xlu0 %579
    %581 = vrot.lane.b32.xlu0 %v552, 64
    %v582 = vpop.permute.xlu0 %581
    %583 = vrot.lane.b32.xlu0 %v553, 64
    %v584 = vpop.permute.xlu0 %583
    %585 = vrot.lane.b32.xlu0 %v554, 64
    %v586 = vpop.permute.xlu0 %585
    %vm587 = vcmask 130048
    %v589 = vsel %vm587, %v551, 0
    %v592 = vsel %vm587, %v552, 0
    %v595 = vsel %vm587, %v553, 0
    %v598 = vsel %vm587, %v554, 0
    %v601 = vsel %vm587, %v580, 0
    %v604 = vsel %vm587, %v582, 0
    %v607 = vsel %vm587, %v584, 0
    %v610 = vsel %vm587, %v586, 0
    %612 = vmatpush.bf16.xpose.msra.mxu0 0
    %613 = vmatpush.bf16.xpose.msra.mxu0 0
    %614 = vmatpush.bf16.xpose.msra.mxu0 0
    %615 = vmatpush.bf16.xpose.msra.mxu0 0
    %616 = vmatpush.bf16.xpose.msra.mxu0 %v610
    %617 = vmatpush.bf16.xpose.msra.mxu0 %v607
    %618 = vmatpush.bf16.xpose.msra.mxu0 %v604
    %619 = vmatpush.bf16.xpose.msra.mxu0 %v601
    %620 = vmatmul.bf16.gmra.mxu0 %v589
    %v621 = vpop.f32.mrf.mxu0
    %v622 = vadd.f32 %v389, %v621
    %v623 = vpop.f32.mrf.mxu0
    %v624 = vadd.f32 %v390, %v623
    %625 = vmatmul.bf16.gmra.mxu0 %v592
    %v626 = vpop.f32.mrf.mxu0
    %v627 = vadd.f32 %v391, %v626
    %v628 = vpop.f32.mrf.mxu0
    %v629 = vadd.f32 %v392, %v628
    %630 = vmatmul.bf16.gmra.mxu0 %v595
    %v631 = vpop.f32.mrf.mxu0
    %v632 = vadd.f32 %v393, %v631
    %v633 = vpop.f32.mrf.mxu0
    %v634 = vadd.f32 %v394, %v633
    %635 = vmatmul.bf16.gmra.mxu0 %v598
    %v636 = vpop.f32.mrf.mxu0
    %v637 = vadd.f32 %v395, %v636
    %v638 = vpop.f32.mrf.mxu0
    %v639 = vadd.f32 %v396, %v638
    %640 = vdwg.mxu0
    %v641 = vsel %vm327, %v622, -inf
    %642 = vmax.xlane.f32.xlu0 %v641
    %v643 = vpop.xlane.xlu0 %642
    %v644 = vsel %vm327, %v624, -inf
    %645 = vmax.xlane.f32.xlu0 %v644
    %v646 = vpop.xlane.xlu0 %645
    %v647 = vsel %vm327, %v627, -inf
    %648 = vmax.xlane.f32.xlu0 %v647
    %v649 = vpop.xlane.xlu0 %648
    %v650 = vsel %vm327, %v629, -inf
    %651 = vmax.xlane.f32.xlu0 %v650
    %v652 = vpop.xlane.xlu0 %651
    %v653 = vsel %vm327, %v632, -inf
    %654 = vmax.xlane.f32.xlu0 %v653
    %v655 = vpop.xlane.xlu0 %654
    %v656 = vsel %vm327, %v634, -inf
    %657 = vmax.xlane.f32.xlu0 %v656
    %v658 = vpop.xlane.xlu0 %657
    %v659 = vsel %vm327, %v637, -inf
    %660 = vmax.xlane.f32.xlu0 %v659
    %v661 = vpop.xlane.xlu0 %660
    %v662 = vsel %vm327, %v639, -inf
    %663 = vmax.xlane.f32.xlu0 %v662
    %v664 = vpop.xlane.xlu0 %663
    %v665 = vsub.f32 %v622, %v643
    %v666 = vsub.f32 %v624, %v646
    %v667 = vsub.f32 %v627, %v649
    %v668 = vsub.f32 %v629, %v652
    %v669 = vsub.f32 %v632, %v655
    %v670 = vsub.f32 %v634, %v658
    %v671 = vsub.f32 %v637, %v661
    %v672 = vsub.f32 %v639, %v664
    %v673 = vmul.f32 %v665, 1.442695
    %v674 = vpow.pop %v673
    %v675 = vmul.f32 %v666, 1.442695
    %v676 = vpow.pop %v675
    %v677 = vmul.f32 %v667, 1.442695
    %v678 = vpow.pop %v677
    %v679 = vmul.f32 %v668, 1.442695
    %v680 = vpow.pop %v679
    %v681 = vmul.f32 %v669, 1.442695
    %v682 = vpow.pop %v681
    %v683 = vmul.f32 %v670, 1.442695
    %v684 = vpow.pop %v683
    %v685 = vmul.f32 %v671, 1.442695
    %v686 = vpow.pop %v685
    %v687 = vmul.f32 %v672, 1.442695
    %v688 = vpow.pop %v687
    %v689 = vsel %vm327, %v674, 0.0
    %690 = vadd.xlane.f32.xlu0 %v689
    %v691 = vpop.xlane.xlu0 %690
    %v692 = vsel %vm327, %v676, 0.0
    %693 = vadd.xlane.f32.xlu0 %v692
    %v694 = vpop.xlane.xlu0 %693
    %v695 = vsel %vm327, %v678, 0.0
    %696 = vadd.xlane.f32.xlu0 %v695
    %v697 = vpop.xlane.xlu0 %696
    %v698 = vsel %vm327, %v680, 0.0
    %699 = vadd.xlane.f32.xlu0 %v698
    %v700 = vpop.xlane.xlu0 %699
    %v701 = vsel %vm327, %v682, 0.0
    %702 = vadd.xlane.f32.xlu0 %v701
    %v703 = vpop.xlane.xlu0 %702
    %v704 = vsel %vm327, %v684, 0.0
    %705 = vadd.xlane.f32.xlu0 %v704
    %v706 = vpop.xlane.xlu0 %705
    %v707 = vsel %vm327, %v686, 0.0
    %708 = vadd.xlane.f32.xlu0 %v707
    %v709 = vpop.xlane.xlu0 %708
    %v710 = vsel %vm327, %v688, 0.0
    %711 = vadd.xlane.f32.xlu0 %v710
    %v712 = vpop.xlane.xlu0 %711
    %v713 = vrcp.pop %v691
    %v714 = vrcp.pop %v694
    %v715 = vrcp.pop %v697
    %v716 = vrcp.pop %v700
    %v717 = vrcp.pop %v703
    %v718 = vrcp.pop %v706
    %v719 = vrcp.pop %v709
    %v720 = vrcp.pop %v712
    %v721 = vmul.f32 %v674, %v713
    %v722 = vmul.f32 %v676, %v714
    %v723 = vmul.f32 %v678, %v715
    %v724 = vmul.f32 %v680, %v716
    %v725 = vmul.f32 %v682, %v717
    %v726 = vmul.f32 %v684, %v718
    %v727 = vmul.f32 %v686, %v719
    %v728 = vmul.f32 %v688, %v720
    %v729 = vpack.c.bf16 %v722, %v721
    %v730 = vpack.c.bf16 %v724, %v723
    %v731 = vpack.c.bf16 %v726, %v725
    %v732 = vpack.c.bf16 %v728, %v727
    %v734 = vsel %vm327, %v729, 0
    %v737 = vsel %vm327, %v730, 0
    %v740 = vsel %vm327, %v731, 0
    %v743 = vsel %vm327, %v732, 0
    %745 = vmatpush.bf16.msra.mxu0 0
    %746 = vmatpush.bf16.msra.mxu0 0
    %747 = vmatpush.bf16.msra.mxu0 0
    %748 = vmatpush.bf16.msra.mxu0 0
    %749 = vmatpush.bf16.msra.mxu0 %v574
    %750 = vmatpush.bf16.msra.mxu0 %v573
    %751 = vmatpush.bf16.msra.mxu0 %v572
    %752 = vmatpush.bf16.msra.mxu0 %v571
    %753 = vmatmul.bf16.gmra.mxu0 %v734
    %v754 = vpop.f32.mrf.mxu0
    %v755 = vadd.f32 0.0, %v754
    %v756 = vpop.f32.mrf.mxu0
    %v757 = vadd.f32 0.0, %v756
    %758 = vmatmul.bf16.gmra.mxu0 %v737
    %v759 = vpop.f32.mrf.mxu0
    %v760 = vadd.f32 0.0, %v759
    %v761 = vpop.f32.mrf.mxu0
    %v762 = vadd.f32 0.0, %v761
    %763 = vmatmul.bf16.gmra.mxu0 %v740
    %v764 = vpop.f32.mrf.mxu0
    %v765 = vadd.f32 0.0, %v764
    %v766 = vpop.f32.mrf.mxu0
    %v767 = vadd.f32 0.0, %v766
    %768 = vmatmul.bf16.gmra.mxu0 %v743
    %v769 = vpop.f32.mrf.mxu0
    %v770 = vadd.f32 0.0, %v769
    %v771 = vpop.f32.mrf.mxu0
    %v772 = vadd.f32 0.0, %v771
    %773 = vdwg.mxu0
    %v774 = vld [vmem:[%s8] sm:$0x1]
    %v776 = vperm.slane %v774, 0
    %v778 = vadd.f32 %v776, %v755
    %v779 = vadd.f32 %v776, %v757
    %v780 = vadd.f32 %v778, %v760
    %v781 = vadd.f32 %v779, %v762
    %v782 = vadd.f32 %v780, %v765
    %v783 = vadd.f32 %v781, %v767
    %v784 = vadd.f32 %v782, %v770
    %v785 = vadd.f32 %v783, %v772
    %v786 = vadd.f32 %v387, %v784
    %v787 = vadd.f32 %v388, %v785
    %v788 = vld [vmem:[%s9] sm:$0x1]
    %v789 = vld [vmem:[#allocation11] sm:$0x1]
    %v790 = vsel %vm327, %v786, 0.0
    %791 = vadd.xlane.f32.xlu0 %v790
    %v792 = vpop.xlane.xlu0 %791
    %v793 = vsel %vm327, %v787, 0.0
    %794 = vadd.xlane.f32.xlu0 %v793
    %v795 = vpop.xlane.xlu0 %794
    %v796 = vmul.f32 %v792, %v340
    %v797 = vmul.f32 %v795, %v340
    %v798 = vsub.f32 %v786, %v796
    %v799 = vsub.f32 %v787, %v797
    %v800 = vmul.f32 %v798, %v798
    %v801 = vmul.f32 %v799, %v799
    %v802 = vsel %vm327, %v800, 0.0
    %803 = vadd.xlane.f32.xlu0 %v802
    %v804 = vpop.xlane.xlu0 %803
    %v805 = vsel %vm327, %v801, 0.0
    %806 = vadd.xlane.f32.xlu0 %v805
    %v807 = vpop.xlane.xlu0 %806
    %v808 = vmul.f32 %v804, %v340
    %v809 = vmul.f32 %v807, %v340
    %v810 = vadd.f32 %v808, 1e-12
    %v811 = vadd.f32 %v809, 1e-12
    %v812 = vrsqrt.pop %v810
    %v813 = vmul.f32 %v812, %v810
    %v814 = vmul.f32 %v813, %v812
    %v815 = vmul.f32 0.5, %v814
    %v816 = vsub.f32 1.5, %v815
    %v817 = vmul.f32 %v812, %v816
    %vm818 = vweird.f32 %v810
    %vm819 = vweird.f32 %v812
    %vm820 = vmor %vm818, %vm819
    %v821 = vsel %vm820, %v812, %v817
    %v822 = vrsqrt.pop %v811
    %v823 = vmul.f32 %v822, %v811
    %v824 = vmul.f32 %v823, %v822
    %v825 = vmul.f32 0.5, %v824
    %v826 = vsub.f32 1.5, %v825
    %v827 = vmul.f32 %v822, %v826
    %vm828 = vweird.f32 %v811
    %vm829 = vweird.f32 %v822
    %vm830 = vmor %vm828, %vm829
    %v831 = vsel %vm830, %v822, %v827
    %v832 = vmul.f32 %v798, %v821
    %v833 = vmul.f32 %v799, %v831
    %v835 = vperm.slane %v788, 0
    %v837 = vmul.f32 %v832, %v835
    %v838 = vmul.f32 %v833, %v835
    %v840 = vperm.slane %v789, 0
    %v842 = vadd.f32 %v837, %v840
    %v843 = vadd.f32 %v838, %v840
    %v844 = vpack.c.bf16 %v843, %v842
    %v845 = vld [vmem:[#allocation13] sm:$0xf]
    %v846 = vld [vmem:[#allocation13 + $0x4] sm:$0xf]
    %v847 = vld [vmem:[#allocation13 + $0x8] sm:$0xf]
    %v848 = vld [vmem:[#allocation13 + $0xc] sm:$0xf]
    %v849 = vld [vmem:[#allocation13 + $0x10] sm:$0xf]
    %v850 = vld [vmem:[#allocation13 + $0x14] sm:$0xf]
    %v851 = vld [vmem:[#allocation13 + $0x18] sm:$0xf]
    %v852 = vld [vmem:[#allocation13 + $0x1c] sm:$0xf]
    %v853 = vld [vmem:[#allocation14] sm:$0x1]
    %v855 = vperm.slane %v853, 0
    %v865 = vunpack.c.l.b16 %v845
    %v866 = vunpack.c.l.b16 %v846
    %v867 = vunpack.c.l.b16 %v847
    %v868 = vunpack.c.l.b16 %v848
    %v869 = vunpack.c.l.b16 %v849
    %v870 = vunpack.c.l.b16 %v850
    %v871 = vunpack.c.l.b16 %v851
    %v872 = vunpack.c.l.b16 %v852
    %v873 = vpack.c.b16 %v866, %v865
    %v874 = vpack.c.b16 %v868, %v867
    %v875 = vpack.c.b16 %v870, %v869
    %v876 = vpack.c.b16 %v872, %v871
    %v882 = vsel %vm327, %v844, 0
    %884 = vmatpush.bf16.msra.mxu0 0
    %885 = vmatpush.bf16.msra.mxu0 0
    %886 = vmatpush.bf16.msra.mxu0 0
    %887 = vmatpush.bf16.msra.mxu0 0
    %888 = vmatpush.bf16.msra.mxu0 %v876
    %889 = vmatpush.bf16.msra.mxu0 %v875
    %890 = vmatpush.bf16.msra.mxu0 %v874
    %891 = vmatpush.bf16.msra.mxu0 %v873
    %892 = vmatmul.bf16.gmra.mxu0 %v882
    %v893 = vpop.f32.mrf.mxu0
    %v894 = vadd.f32 %v855, %v893
    %v895 = vpop.f32.mrf.mxu0
    %v896 = vadd.f32 %v855, %v895
    %897 = vdwg.mxu0
    %v898 = vmul.f32 %v894, %v894
    %v899 = vmul.f32 %v896, %v896
    %v900 = vmul.f32 %v894, %v898
    %v901 = vmul.f32 %v896, %v899
    %v902 = vmul.f32 %v900, 0.044715
    %v903 = vmul.f32 %v901, 0.044715
    %v904 = vadd.f32 %v894, %v902
    %v905 = vadd.f32 %v896, %v903
    %v906 = vmul.f32 %v904, 0.7978846
    %v907 = vmul.f32 %v905, 0.7978846
    %v908 = vtanh.pop %v906
    %v909 = vtanh.pop %v907
    %v910 = vadd.f32 %v908, 1.0
    %v911 = vadd.f32 %v909, 1.0
    %v912 = vmul.f32 %v910, 0.5
    %v913 = vmul.f32 %v911, 0.5
    %v914 = vmul.f32 %v894, %v912
    %v915 = vmul.f32 %v896, %v913
    %v916 = vpack.c.bf16 %v915, %v914
    %v917 = vld [vmem:[%s13] sm:$0xf]
    %v918 = vld [vmem:[%s13 + $0x4] sm:$0xf]
    %v919 = vld [vmem:[%s13 + $0x8] sm:$0xf]
    %v920 = vld [vmem:[%s13 + $0xc] sm:$0xf]
    %v921 = vld [vmem:[%s13 + $0x10] sm:$0xf]
    %v922 = vld [vmem:[%s13 + $0x14] sm:$0xf]
    %v923 = vld [vmem:[%s13 + $0x18] sm:$0xf]
    %v924 = vld [vmem:[%s13 + $0x1c] sm:$0xf]
    %v925 = vld [vmem:[%s13 + $0x20] sm:$0xf]
    %v926 = vld [vmem:[%s13 + $0x24] sm:$0xf]
    %v927 = vld [vmem:[%s13 + $0x28] sm:$0xf]
    %v928 = vld [vmem:[%s13 + $0x2c] sm:$0xf]
    %v929 = vld [vmem:[%s13 + $0x30] sm:$0xf]
    %v930 = vld [vmem:[%s13 + $0x34] sm:$0xf]
    %v931 = vld [vmem:[%s13 + $0x38] sm:$0xf]
    %v932 = vld [vmem:[%s13 + $0x3c] sm:$0xf]
    %v933 = vld [vmem:[#allocation16] sm:$0x1]
    %v935 = vperm.slane %v933, 0
    %v953 = vunpack.c.l.b16 %v917
    %v954 = vunpack.c.l.b16 %v918
    %v955 = vunpack.c.l.b16 %v919
    %v956 = vunpack.c.l.b16 %v920
    %v957 = vunpack.c.l.b16 %v921
    %v958 = vunpack.c.l.b16 %v922
    %v959 = vunpack.c.l.b16 %v923
    %v960 = vunpack.c.l.b16 %v924
    %v961 = vunpack.c.l.b16 %v925
    %v962 = vunpack.c.l.b16 %v926
    %v963 = vunpack.c.l.b16 %v927
    %v964 = vunpack.c.l.b16 %v928
    %v965 = vunpack.c.l.b16 %v929
    %v966 = vunpack.c.l.b16 %v930
    %v967 = vunpack.c.l.b16 %v931
    %v968 = vunpack.c.l.b16 %v932
    %v969 = vpack.c.b16 %v954, %v953
    %v970 = vpack.c.b16 %v956, %v955
    %v971 = vpack.c.b16 %v958, %v957
    %v972 = vpack.c.b16 %v960, %v959
    %v973 = vpack.c.b16 %v962, %v961
    %v974 = vpack.c.b16 %v964, %v963
    %v975 = vpack.c.b16 %v966, %v965
    %v976 = vpack.c.b16 %v968, %v967
    %985 = vmatpush.bf16.msra.mxu0 %v976
    %986 = vmatpush.bf16.msra.mxu0 %v975
    %987 = vmatpush.bf16.msra.mxu0 %v974
    %988 = vmatpush.bf16.msra.mxu0 %v973
    %989 = vmatpush.bf16.msra.mxu0 %v972
    %990 = vmatpush.bf16.msra.mxu0 %v971
    %991 = vmatpush.bf16.msra.mxu0 %v970
    %992 = vmatpush.bf16.msra.mxu0 %v969
    %993 = vmatmul.bf16.gmra.mxu0 %v916
    %v994 = vpop.f32.mrf.mxu0
    %v995 = vadd.f32 %v935, %v994
    %v996 = vpop.f32.mrf.mxu0
    %v997 = vadd.f32 %v935, %v996
    %998 = vdwg.mxu0
    %v999 = vadd.f32 %v842, %v995
    %v1000 = vadd.f32 %v843, %v997
    %v1001 = vld [vmem:[#allocation17] sm:$0x1]
    %v1002 = vld [vmem:[%s16] sm:$0x1]
    %v1003 = vsel %vm327, %v999, 0.0
    %1004 = vadd.xlane.f32.xlu0 %v1003
    %v1005 = vpop.xlane.xlu0 %1004
    %v1006 = vsel %vm327, %v1000, 0.0
    %1007 = vadd.xlane.f32.xlu0 %v1006
    %v1008 = vpop.xlane.xlu0 %1007
    %v1009 = vmul.f32 %v1005, %v340
    %v1010 = vmul.f32 %v1008, %v340
    %v1011 = vsub.f32 %v999, %v1009
    %v1012 = vsub.f32 %v1000, %v1010
    %v1013 = vmul.f32 %v1011, %v1011
    %v1014 = vmul.f32 %v1012, %v1012
    %v1015 = vsel %vm327, %v1013, 0.0
    %1016 = vadd.xlane.f32.xlu0 %v1015
    %v1017 = vpop.xlane.xlu0 %1016
    %v1018 = vsel %vm327, %v1014, 0.0
    %1019 = vadd.xlane.f32.xlu0 %v1018
    %v1020 = vpop.xlane.xlu0 %1019
    %v1021 = vmul.f32 %v1017, %v340
    %v1022 = vmul.f32 %v1020, %v340
    %v1023 = vadd.f32 %v1021, 1e-12
    %v1024 = vadd.f32 %v1022, 1e-12
    %v1025 = vrsqrt.pop %v1023
    %v1026 = vmul.f32 %v1025, %v1023
    %v1027 = vmul.f32 %v1026, %v1025
    %v1028 = vmul.f32 0.5, %v1027
    %v1029 = vsub.f32 1.5, %v1028
    %v1030 = vmul.f32 %v1025, %v1029
    %vm1031 = vweird.f32 %v1023
    %vm1032 = vweird.f32 %v1025
    %vm1033 = vmor %vm1031, %vm1032
    %v1034 = vsel %vm1033, %v1025, %v1030
    %v1035 = vrsqrt.pop %v1024
    %v1036 = vmul.f32 %v1035, %v1024
    %v1037 = vmul.f32 %v1036, %v1035
    %v1038 = vmul.f32 0.5, %v1037
    %v1039 = vsub.f32 1.5, %v1038
    %v1040 = vmul.f32 %v1035, %v1039
    %vm1041 = vweird.f32 %v1024
    %vm1042 = vweird.f32 %v1035
    %vm1043 = vmor %vm1041, %vm1042
    %v1044 = vsel %vm1043, %v1035, %v1040
    %v1045 = vmul.f32 %v1011, %v1034
    %v1046 = vmul.f32 %v1012, %v1044
    %v1048 = vperm.slane %v1001, 0
    %v1050 = vmul.f32 %v1045, %v1048
    %v1051 = vmul.f32 %v1046, %v1048
    %v1053 = vperm.slane %v1002, 0
    %v1055 = vadd.f32 %v1050, %v1053
    %v1056 = vadd.f32 %v1051, %v1053
    %v1057 = vpack.c.bf16 %v1056, %v1055
    %s1058 = scalar_lea.vmem %s6, 96
    %v1059 = vld [vmem:[%s1058] sm:$0xff]
    %v1060 = vld [vmem:[%s1058 + $0x8] sm:$0xf]
    %v1061 = vld [vmem:[%s1058 + $0xc] sm:$0xff]
    %v1062 = vld [vmem:[%s1058 + $0x14] sm:$0xf]
    %v1063 = vld [vmem:[%s1058 + $0x18] sm:$0xff]
    %v1064 = vld [vmem:[%s1058 + $0x20] sm:$0xf]
    %v1065 = vld [vmem:[%s1058 + $0x24] sm:$0xff]
    %v1066 = vld [vmem:[%s1058 + $0x2c] sm:$0xf]
    %v1067 = vld [vmem:[%s1058 + $0x30] sm:$0xff]
    %v1068 = vld [vmem:[%s1058 + $0x38] sm:$0xf]
    %v1069 = vld [vmem:[%s1058 + $0x3c] sm:$0xff]
    %v1070 = vld [vmem:[%s1058 + $0x44] sm:$0xf]
    %v1071 = vld [vmem:[%s1058 + $0x48] sm:$0xff]
    %v1072 = vld [vmem:[%s1058 + $0x50] sm:$0xf]
    %v1073 = vld [vmem:[%s1058 + $0x54] sm:$0xff]
    %v1074 = vld [vmem:[%s1058 + $0x5c] sm:$0xf]
    %s1075 = scalar_lea.vmem [#allocation10], 3
    %v1076 = vld [vmem:[%s1075] sm:$0x7]
    %v1078 = vperm.slane %v1076, 0
    %v1079 = vperm.slane %v1076, 1
    %v1080 = vperm.slane %v1076, 2
    %v1100 = vunpack.c.l.b16 %v1059
    %v1101 = vunpack.c.h.b16 %v1059
    %v1102 = vunpack.c.l.b16 %v1060
    %v1103 = vunpack.c.l.b16 %v1061
    %v1104 = vunpack.c.h.b16 %v1061
    %v1105 = vunpack.c.l.b16 %v1062
    %v1106 = vunpack.c.l.b16 %v1063
    %v1107 = vunpack.c.h.b16 %v1063
    %v1108 = vunpack.c.l.b16 %v1064
    %v1109 = vunpack.c.l.b16 %v1065
    %v1110 = vunpack.c.h.b16 %v1065
    %v1111 = vunpack.c.l.b16 %v1066
    %v1112 = vunpack.c.l.b16 %v1067
    %v1113 = vunpack.c.h.b16 %v1067
    %v1114 = vunpack.c.l.b16 %v1068
    %v1115 = vunpack.c.l.b16 %v1069
    %v1116 = vunpack.c.h.b16 %v1069
    %v1117 = vunpack.c.l.b16 %v1070
    %v1118 = vunpack.c.l.b16 %v1071
    %v1119 = vunpack.c.h.b16 %v1071
    %v1120 = vunpack.c.l.b16 %v1072
    %v1121 = vunpack.c.l.b16 %v1073
    %v1122 = vunpack.c.h.b16 %v1073
    %v1123 = vunpack.c.l.b16 %v1074
    %v1124 = vpack.c.b16 %v1103, %v1100
    %v1125 = vpack.c.b16 %v1104, %v1101
    %v1126 = vpack.c.b16 %v1105, %v1102
    %v1127 = vpack.c.b16 %v1109, %v1106
    %v1128 = vpack.c.b16 %v1110, %v1107
    %v1129 = vpack.c.b16 %v1111, %v1108
    %v1130 = vpack.c.b16 %v1115, %v1112
    %v1131 = vpack.c.b16 %v1116, %v1113
    %v1132 = vpack.c.b16 %v1117, %v1114
    %v1133 = vpack.c.b16 %v1121, %v1118
    %v1134 = vpack.c.b16 %v1122, %v1119
    %v1135 = vpack.c.b16 %v1123, %v1120
    %v1149 = vsel %vm327, %v1057, 0
    %1151 = vmatpush.bf16.msra.mxu0 0
    %1152 = vmatpush.bf16.msra.mxu0 0
    %1153 = vmatpush.bf16.msra.mxu0 0
    %1154 = vmatpush.bf16.msra.mxu0 0
    %1155 = vmatpush.bf16.msra.mxu0 %v1133
    %1156 = vmatpush.bf16.msra.mxu0 %v1130
    %1157 = vmatpush.bf16.msra.mxu0 %v1127
    %1158 = vmatpush.bf16.msra.mxu0 %v1124
    %1159 = vmatmul.bf16.gmra.mxu0 %v1149
    %v1160 = vpop.f32.mrf.mxu0
    %v1161 = vadd.f32 %v1078, %v1160
    %v1162 = vpop.f32.mrf.mxu0
    %v1163 = vadd.f32 %v1078, %v1162
    %1164 = vdwg.mxu0
    %1165 = vmatpush.bf16.msra.mxu0 0
    %1166 = vmatpush.bf16.msra.mxu0 0
    %1167 = vmatpush.bf16.msra.mxu0 0
    %1168 = vmatpush.bf16.msra.mxu0 0
    %1169 = vmatpush.bf16.msra.mxu0 %v1134
    %1170 = vmatpush.bf16.msra.mxu0 %v1131
    %1171 = vmatpush.bf16.msra.mxu0 %v1128
    %1172 = vmatpush.bf16.msra.mxu0 %v1125
    %1173 = vmatmul.bf16.gmra.mxu0 %v1149
    %v1174 = vpop.f32.mrf.mxu0
    %v1175 = vadd.f32 %v1079, %v1174
    %v1176 = vpop.f32.mrf.mxu0
    %v1177 = vadd.f32 %v1079, %v1176
    %1178 = vdwg.mxu0
    %1179 = vmatpush.bf16.msra.mxu0 0
    %1180 = vmatpush.bf16.msra.mxu0 0
    %1181 = vmatpush.bf16.msra.mxu0 0
    %1182 = vmatpush.bf16.msra.mxu0 0
    %1183 = vmatpush.bf16.msra.mxu0 %v1135
    %1184 = vmatpush.bf16.msra.mxu0 %v1132
    %1185 = vmatpush.bf16.msra.mxu0 %v1129
    %1186 = vmatpush.bf16.msra.mxu0 %v1126
    %1187 = vmatmul.bf16.gmra.mxu0 %v1149
    %v1188 = vpop.f32.mrf.mxu0
    %v1189 = vadd.f32 %v1080, %v1188
    %v1190 = vpop.f32.mrf.mxu0
    %v1191 = vadd.f32 %v1080, %v1190
    %1192 = vdwg.mxu0
    %1195 = vrot.lane.b32.xlu0 %v1161, 112
    %v1196 = vpop.permute.xlu0 %1195
    %1197 = vrot.lane.b32.xlu0 %v1163, 112
    %v1198 = vpop.permute.xlu0 %1197
    %1201 = vrot.lane.b32.xlu0 %v1161, 96
    %v1202 = vpop.permute.xlu0 %1201
    %1203 = vrot.lane.b32.xlu0 %v1163, 96
    %v1204 = vpop.permute.xlu0 %1203
    %1207 = vrot.lane.b32.xlu0 %v1161, 80
    %v1208 = vpop.permute.xlu0 %1207
    %1209 = vrot.lane.b32.xlu0 %v1163, 80
    %v1210 = vpop.permute.xlu0 %1209
    %v1213 = vpack.c.bf16 %v1163, %v1161
    %v1214 = vpack.c.bf16 %v1198, %v1196
    %v1215 = vpack.c.bf16 %v1204, %v1202
    %v1216 = vpack.c.bf16 %v1210, %v1208
    %1219 = vrot.lane.b32.xlu0 %v1175, 64
    %v1220 = vpop.permute.xlu0 %1219
    %1221 = vrot.lane.b32.xlu0 %v1177, 64
    %v1222 = vpop.permute.xlu0 %1221
    %1227 = vrot.lane.b32.xlu0 %v1189, 64
    %v1228 = vpop.permute.xlu0 %1227
    %1229 = vrot.lane.b32.xlu0 %v1191, 64
    %v1230 = vpop.permute.xlu0 %1229
    %v1233 = vpack.c.bf16 %v1177, %v1175
    %v1234 = vpack.c.bf16 %v1222, %v1220
    %v1235 = vpack.c.bf16 %v1191, %v1189
    %v1236 = vpack.c.bf16 %v1230, %v1228
    %1241 = vrot.lane.b32.xlu0 %v1213, 64
    %v1242 = vpop.permute.xlu0 %1241
    %1243 = vrot.lane.b32.xlu0 %v1214, 64
    %v1244 = vpop.permute.xlu0 %1243
    %1245 = vrot.lane.b32.xlu0 %v1215, 64
    %v1246 = vpop.permute.xlu0 %1245
    %1247 = vrot.lane.b32.xlu0 %v1216, 64
    %v1248 = vpop.permute.xlu0 %1247
    %v1250 = vsel %vm587, %v1213, 0
    %v1253 = vsel %vm587, %v1214, 0
    %v1256 = vsel %vm587, %v1215, 0
    %v1259 = vsel %vm587, %v1216, 0
    %v1262 = vsel %vm587, %v1242, 0
    %v1265 = vsel %vm587, %v1244, 0
    %v1268 = vsel %vm587, %v1246, 0
    %v1271 = vsel %vm587, %v1248, 0
    %1273 = vmatpush.bf16.xpose.msra.mxu0 0
    %1274 = vmatpush.bf16.xpose.msra.mxu0 0
    %1275 = vmatpush.bf16.xpose.msra.mxu0 0
    %1276 = vmatpush.bf16.xpose.msra.mxu0 0
    %1277 = vmatpush.bf16.xpose.msra.mxu0 %v1271
    %1278 = vmatpush.bf16.xpose.msra.mxu0 %v1268
    %1279 = vmatpush.bf16.xpose.msra.mxu0 %v1265
    %1280 = vmatpush.bf16.xpose.msra.mxu0 %v1262
    %1281 = vmatmul.bf16.gmra.mxu0 %v1250
    %v1282 = vpop.f32.mrf.mxu0
    %v1283 = vadd.f32 %v389, %v1282
    %v1284 = vpop.f32.mrf.mxu0
    %v1285 = vadd.f32 %v390, %v1284
    %1286 = vmatmul.bf16.gmra.mxu0 %v1253
    %v1287 = vpop.f32.mrf.mxu0
    %v1288 = vadd.f32 %v391, %v1287
    %v1289 = vpop.f32.mrf.mxu0
    %v1290 = vadd.f32 %v392, %v1289
    %1291 = vmatmul.bf16.gmra.mxu0 %v1256
    %v1292 = vpop.f32.mrf.mxu0
    %v1293 = vadd.f32 %v393, %v1292
    %v1294 = vpop.f32.mrf.mxu0
    %v1295 = vadd.f32 %v394, %v1294
    %1296 = vmatmul.bf16.gmra.mxu0 %v1259
    %v1297 = vpop.f32.mrf.mxu0
    %v1298 = vadd.f32 %v395, %v1297
    %v1299 = vpop.f32.mrf.mxu0
    %v1300 = vadd.f32 %v396, %v1299
    %1301 = vdwg.mxu0
    %v1302 = vsel %vm327, %v1283, -inf
    %1303 = vmax.xlane.f32.xlu0 %v1302
    %v1304 = vpop.xlane.xlu0 %1303
    %v1305 = vsel %vm327, %v1285, -inf
    %1306 = vmax.xlane.f32.xlu0 %v1305
    %v1307 = vpop.xlane.xlu0 %1306
    %v1308 = vsel %vm327, %v1288, -inf
    %1309 = vmax.xlane.f32.xlu0 %v1308
    %v1310 = vpop.xlane.xlu0 %1309
    %v1311 = vsel %vm327, %v1290, -inf
    %1312 = vmax.xlane.f32.xlu0 %v1311
    %v1313 = vpop.xlane.xlu0 %1312
    %v1314 = vsel %vm327, %v1293, -inf
    %1315 = vmax.xlane.f32.xlu0 %v1314
    %v1316 = vpop.xlane.xlu0 %1315
    %v1317 = vsel %vm327, %v1295, -inf
    %1318 = vmax.xlane.f32.xlu0 %v1317
    %v1319 = vpop.xlane.xlu0 %1318
    %v1320 = vsel %vm327, %v1298, -inf
    %1321 = vmax.xlane.f32.xlu0 %v1320
    %v1322 = vpop.xlane.xlu0 %1321
    %v1323 = vsel %vm327, %v1300, -inf
    %1324 = vmax.xlane.f32.xlu0 %v1323
    %v1325 = vpop.xlane.xlu0 %1324
    %v1326 = vsub.f32 %v1283, %v1304
    %v1327 = vsub.f32 %v1285, %v1307
    %v1328 = vsub.f32 %v1288, %v1310
    %v1329 = vsub.f32 %v1290, %v1313
    %v1330 = vsub.f32 %v1293, %v1316
    %v1331 = vsub.f32 %v1295, %v1319
    %v1332 = vsub.f32 %v1298, %v1322
    %v1333 = vsub.f32 %v1300, %v1325
    %v1334 = vmul.f32 %v1326, 1.442695
    %v1335 = vpow.pop %v1334
    %v1336 = vmul.f32 %v1327, 1.442695
    %v1337 = vpow.pop %v1336
    %v1338 = vmul.f32 %v1328, 1.442695
    %v1339 = vpow.pop %v1338
    %v1340 = vmul.f32 %v1329, 1.442695
    %v1341 = vpow.pop %v1340
    %v1342 = vmul.f32 %v1330, 1.442695
    %v1343 = vpow.pop %v1342
    %v1344 = vmul.f32 %v1331, 1.442695
    %v1345 = vpow.pop %v1344
    %v1346 = vmul.f32 %v1332, 1.442695
    %v1347 = vpow.pop %v1346
    %v1348 = vmul.f32 %v1333, 1.442695
    %v1349 = vpow.pop %v1348
    %v1350 = vsel %vm327, %v1335, 0.0
    %1351 = vadd.xlane.f32.xlu0 %v1350
    %v1352 = vpop.xlane.xlu0 %1351
    %v1353 = vsel %vm327, %v1337, 0.0
    %1354 = vadd.xlane.f32.xlu0 %v1353
    %v1355 = vpop.xlane.xlu0 %1354
    %v1356 = vsel %vm327, %v1339, 0.0
    %1357 = vadd.xlane.f32.xlu0 %v1356
    %v1358 = vpop.xlane.xlu0 %1357
    %v1359 = vsel %vm327, %v1341, 0.0
    %1360 = vadd.xlane.f32.xlu0 %v1359
    %v1361 = vpop.xlane.xlu0 %1360
    %v1362 = vsel %vm327, %v1343, 0.0
    %1363 = vadd.xlane.f32.xlu0 %v1362
    %v1364 = vpop.xlane.xlu0 %1363
    %v1365 = vsel %vm327, %v1345, 0.0
    %1366 = vadd.xlane.f32.xlu0 %v1365
    %v1367 = vpop.xlane.xlu0 %1366
    %v1368 = vsel %vm327, %v1347, 0.0
    %1369 = vadd.xlane.f32.xlu0 %v1368
    %v1370 = vpop.xlane.xlu0 %1369
    %v1371 = vsel %vm327, %v1349, 0.0
    %1372 = vadd.xlane.f32.xlu0 %v1371
    %v1373 = vpop.xlane.xlu0 %1372
    %v1374 = vrcp.pop %v1352
    %v1375 = vrcp.pop %v1355
    %v1376 = vrcp.pop %v1358
    %v1377 = vrcp.pop %v1361
    %v1378 = vrcp.pop %v1364
    %v1379 = vrcp.pop %v1367
    %v1380 = vrcp.pop %v1370
    %v1381 = vrcp.pop %v1373
    %v1382 = vmul.f32 %v1335, %v1374
    %v1383 = vmul.f32 %v1337, %v1375
    %v1384 = vmul.f32 %v1339, %v1376
    %v1385 = vmul.f32 %v1341, %v1377
    %v1386 = vmul.f32 %v1343, %v1378
    %v1387 = vmul.f32 %v1345, %v1379
    %v1388 = vmul.f32 %v1347, %v1380
    %v1389 = vmul.f32 %v1349, %v1381
    %v1390 = vpack.c.bf16 %v1383, %v1382
    %v1391 = vpack.c.bf16 %v1385, %v1384
    %v1392 = vpack.c.bf16 %v1387, %v1386
    %v1393 = vpack.c.bf16 %v1389, %v1388
    %v1395 = vsel %vm327, %v1390, 0
    %v1398 = vsel %vm327, %v1391, 0
    %v1401 = vsel %vm327, %v1392, 0
    %v1404 = vsel %vm327, %v1393, 0
    %1406 = vmatpush.bf16.msra.mxu0 0
    %1407 = vmatpush.bf16.msra.mxu0 0
    %1408 = vmatpush.bf16.msra.mxu0 0
    %1409 = vmatpush.bf16.msra.mxu0 0
    %1410 = vmatpush.bf16.msra.mxu0 %v1236
    %1411 = vmatpush.bf16.msra.mxu0 %v1235
    %1412 = vmatpush.bf16.msra.mxu0 %v1234
    %1413 = vmatpush.bf16.msra.mxu0 %v1233
    %1414 = vmatmul.bf16.gmra.mxu0 %v1395
    %v1415 = vpop.f32.mrf.mxu0
    %v1416 = vadd.f32 0.0, %v1415
    %v1417 = vpop.f32.mrf.mxu0
    %v1418 = vadd.f32 0.0, %v1417
    %1419 = vmatmul.bf16.gmra.mxu0 %v1398
    %v1420 = vpop.f32.mrf.mxu0
    %v1421 = vadd.f32 0.0, %v1420
    %v1422 = vpop.f32.mrf.mxu0
    %v1423 = vadd.f32 0.0, %v1422
    %1424 = vmatmul.bf16.gmra.mxu0 %v1401
    %v1425 = vpop.f32.mrf.mxu0
    %v1426 = vadd.f32 0.0, %v1425
    %v1427 = vpop.f32.mrf.mxu0
    %v1428 = vadd.f32 0.0, %v1427
    %1429 = vmatmul.bf16.gmra.mxu0 %v1404
    %v1430 = vpop.f32.mrf.mxu0
    %v1431 = vadd.f32 0.0, %v1430
    %v1432 = vpop.f32.mrf.mxu0
    %v1433 = vadd.f32 0.0, %v1432
    %1434 = vdwg.mxu0
    %s1435 = scalar_lea.vmem %s8, 1
    %v1436 = vld [vmem:[%s1435] sm:$0x1]
    %v1438 = vperm.slane %v1436, 0
    %v1440 = vadd.f32 %v1438, %v1416
    %v1441 = vadd.f32 %v1438, %v1418
    %v1442 = vadd.f32 %v1440, %v1421
    %v1443 = vadd.f32 %v1441, %v1423
    %v1444 = vadd.f32 %v1442, %v1426
    %v1445 = vadd.f32 %v1443, %v1428
    %v1446 = vadd.f32 %v1444, %v1431
    %v1447 = vadd.f32 %v1445, %v1433
    %v1448 = vadd.f32 %v1055, %v1446
    %v1449 = vadd.f32 %v1056, %v1447
    %s1450 = scalar_lea.vmem %s9, 1
    %v1451 = vld [vmem:[%s1450] sm:$0x1]
    %s1452 = scalar_lea.vmem [#allocation11], 1
    %v1453 = vld [vmem:[%s1452] sm:$0x1]
    %v1454 = vsel %vm327, %v1448, 0.0
    %1455 = vadd.xlane.f32.xlu0 %v1454
    %v1456 = vpop.xlane.xlu0 %1455
    %v1457 = vsel %vm327, %v1449, 0.0
    %1458 = vadd.xlane.f32.xlu0 %v1457
    %v1459 = vpop.xlane.xlu0 %1458
    %v1460 = vmul.f32 %v1456, %v340
    %v1461 = vmul.f32 %v1459, %v340
    %v1462 = vsub.f32 %v1448, %v1460
    %v1463 = vsub.f32 %v1449, %v1461
    %v1464 = vmul.f32 %v1462, %v1462
    %v1465 = vmul.f32 %v1463, %v1463
    %v1466 = vsel %vm327, %v1464, 0.0
    %1467 = vadd.xlane.f32.xlu0 %v1466
    %v1468 = vpop.xlane.xlu0 %1467
    %v1469 = vsel %vm327, %v1465, 0.0
    %1470 = vadd.xlane.f32.xlu0 %v1469
    %v1471 = vpop.xlane.xlu0 %1470
    %v1472 = vmul.f32 %v1468, %v340
    %v1473 = vmul.f32 %v1471, %v340
    %v1474 = vadd.f32 %v1472, 1e-12
    %v1475 = vadd.f32 %v1473, 1e-12
    %v1476 = vrsqrt.pop %v1474
    %v1477 = vmul.f32 %v1476, %v1474
    %v1478 = vmul.f32 %v1477, %v1476
    %v1479 = vmul.f32 0.5, %v1478
    %v1480 = vsub.f32 1.5, %v1479
    %v1481 = vmul.f32 %v1476, %v1480
    %vm1482 = vweird.f32 %v1474
    %vm1483 = vweird.f32 %v1476
    %vm1484 = vmor %vm1482, %vm1483
    %v1485 = vsel %vm1484, %v1476, %v1481
    %v1486 = vrsqrt.pop %v1475
    %v1487 = vmul.f32 %v1486, %v1475
    %v1488 = vmul.f32 %v1487, %v1486
    %v1489 = vmul.f32 0.5, %v1488
    %v1490 = vsub.f32 1.5, %v1489
    %v1491 = vmul.f32 %v1486, %v1490
    %vm1492 = vweird.f32 %v1475
    %vm1493 = vweird.f32 %v1486
    %vm1494 = vmor %vm1492, %vm1493
    %v1495 = vsel %vm1494, %v1486, %v1491
    %v1496 = vmul.f32 %v1462, %v1485
    %v1497 = vmul.f32 %v1463, %v1495
    %v1499 = vperm.slane %v1451, 0
    %v1501 = vmul.f32 %v1496, %v1499
    %v1502 = vmul.f32 %v1497, %v1499
    %v1504 = vperm.slane %v1453, 0
    %v1506 = vadd.f32 %v1501, %v1504
    %v1507 = vadd.f32 %v1502, %v1504
    %v1508 = vpack.c.bf16 %v1507, %v1506
    %s1509 = scalar_lea.vmem [#allocation13], 32
    %v1510 = vld [vmem:[%s1509] sm:$0xf]
    %v1511 = vld [vmem:[%s1509 + $0x4] sm:$0xf]
    %v1512 = vld [vmem:[%s1509 + $0x8] sm:$0xf]
    %v1513 = vld [vmem:[%s1509 + $0xc] sm:$0xf]
    %v1514 = vld [vmem:[%s1509 + $0x10] sm:$0xf]
    %v1515 = vld [vmem:[%s1509 + $0x14] sm:$0xf]
    %v1516 = vld [vmem:[%s1509 + $0x18] sm:$0xf]
    %v1517 = vld [vmem:[%s1509 + $0x1c] sm:$0xf]
    %s1518 = scalar_lea.vmem [#allocation14], 1
    %v1519 = vld [vmem:[%s1518] sm:$0x1]
    %v1521 = vperm.slane %v1519, 0
    %v1531 = vunpack.c.l.b16 %v1510
    %v1532 = vunpack.c.l.b16 %v1511
    %v1533 = vunpack.c.l.b16 %v1512
    %v1534 = vunpack.c.l.b16 %v1513
    %v1535 = vunpack.c.l.b16 %v1514
    %v1536 = vunpack.c.l.b16 %v1515
    %v1537 = vunpack.c.l.b16 %v1516
    %v1538 = vunpack.c.l.b16 %v1517
    %v1539 = vpack.c.b16 %v1532, %v1531
    %v1540 = vpack.c.b16 %v1534, %v1533
    %v1541 = vpack.c.b16 %v1536, %v1535
    %v1542 = vpack.c.b16 %v1538, %v1537
    %v1548 = vsel %vm327, %v1508, 0
    %1550 = vmatpush.bf16.msra.mxu0 0
    %1551 = vmatpush.bf16.msra.mxu0 0
    %1552 = vmatpush.bf16.msra.mxu0 0
    %1553 = vmatpush.bf16.msra.mxu0 0
    %1554 = vmatpush.bf16.msra.mxu0 %v1542
    %1555 = vmatpush.bf16.msra.mxu0 %v1541
    %1556 = vmatpush.bf16.msra.mxu0 %v1540
    %1557 = vmatpush.bf16.msra.mxu0 %v1539
    %1558 = vmatmul.bf16.gmra.mxu0 %v1548
    %v1559 = vpop.f32.mrf.mxu0
    %v1560 = vadd.f32 %v1521, %v1559
    %v1561 = vpop.f32.mrf.mxu0
    %v1562 = vadd.f32 %v1521, %v1561
    %1563 = vdwg.mxu0
    %v1564 = vmul.f32 %v1560, %v1560
    %v1565 = vmul.f32 %v1562, %v1562
    %v1566 = vmul.f32 %v1560, %v1564
    %v1567 = vmul.f32 %v1562, %v1565
    %v1568 = vmul.f32 %v1566, 0.044715
    %v1569 = vmul.f32 %v1567, 0.044715
    %v1570 = vadd.f32 %v1560, %v1568
    %v1571 = vadd.f32 %v1562, %v1569
    %v1572 = vmul.f32 %v1570, 0.7978846
    %v1573 = vmul.f32 %v1571, 0.7978846
    %v1574 = vtanh.pop %v1572
    %v1575 = vtanh.pop %v1573
    %v1576 = vadd.f32 %v1574, 1.0
    %v1577 = vadd.f32 %v1575, 1.0
    %v1578 = vmul.f32 %v1576, 0.5
    %v1579 = vmul.f32 %v1577, 0.5
    %v1580 = vmul.f32 %v1560, %v1578
    %v1581 = vmul.f32 %v1562, %v1579
    %v1582 = vpack.c.bf16 %v1581, %v1580
    %s1583 = scalar_lea.vmem %s13, 64
    %v1584 = vld [vmem:[%s1583] sm:$0xf]
    %v1585 = vld [vmem:[%s1583 + $0x4] sm:$0xf]
    %v1586 = vld [vmem:[%s1583 + $0x8] sm:$0xf]
    %v1587 = vld [vmem:[%s1583 + $0xc] sm:$0xf]
    %v1588 = vld [vmem:[%s1583 + $0x10] sm:$0xf]
    %v1589 = vld [vmem:[%s1583 + $0x14] sm:$0xf]
    %v1590 = vld [vmem:[%s1583 + $0x18] sm:$0xf]
    %v1591 = vld [vmem:[%s1583 + $0x1c] sm:$0xf]
    %v1592 = vld [vmem:[%s1583 + $0x20] sm:$0xf]
    %v1593 = vld [vmem:[%s1583 + $0x24] sm:$0xf]
    %v1594 = vld [vmem:[%s1583 + $0x28] sm:$0xf]
    %v1595 = vld [vmem:[%s1583 + $0x2c] sm:$0xf]
    %v1596 = vld [vmem:[%s1583 + $0x30] sm:$0xf]
    %v1597 = vld [vmem:[%s1583 + $0x34] sm:$0xf]
    %v1598 = vld [vmem:[%s1583 + $0x38] sm:$0xf]
    %v1599 = vld [vmem:[%s1583 + $0x3c] sm:$0xf]
    %s1600 = scalar_lea.vmem [#allocation16], 1
    %v1601 = vld [vmem:[%s1600] sm:$0x1]
    %v1603 = vperm.slane %v1601, 0
    %v1621 = vunpack.c.l.b16 %v1584
    %v1622 = vunpack.c.l.b16 %v1585
    %v1623 = vunpack.c.l.b16 %v1586
    %v1624 = vunpack.c.l.b16 %v1587
    %v1625 = vunpack.c.l.b16 %v1588
    %v1626 = vunpack.c.l.b16 %v1589
    %v1627 = vunpack.c.l.b16 %v1590
    %v1628 = vunpack.c.l.b16 %v1591
    %v1629 = vunpack.c.l.b16 %v1592
    %v1630 = vunpack.c.l.b16 %v1593
    %v1631 = vunpack.c.l.b16 %v1594
    %v1632 = vunpack.c.l.b16 %v1595
    %v1633 = vunpack.c.l.b16 %v1596
    %v1634 = vunpack.c.l.b16 %v1597
    %v1635 = vunpack.c.l.b16 %v1598
    %v1636 = vunpack.c.l.b16 %v1599
    %v1637 = vpack.c.b16 %v1622, %v1621
    %v1638 = vpack.c.b16 %v1624, %v1623
    %v1639 = vpack.c.b16 %v1626, %v1625
    %v1640 = vpack.c.b16 %v1628, %v1627
    %v1641 = vpack.c.b16 %v1630, %v1629
    %v1642 = vpack.c.b16 %v1632, %v1631
    %v1643 = vpack.c.b16 %v1634, %v1633
    %v1644 = vpack.c.b16 %v1636, %v1635
    %1653 = vmatpush.bf16.msra.mxu0 %v1644
    %1654 = vmatpush.bf16.msra.mxu0 %v1643
    %1655 = vmatpush.bf16.msra.mxu0 %v1642
    %1656 = vmatpush.bf16.msra.mxu0 %v1641
    %1657 = vmatpush.bf16.msra.mxu0 %v1640
    %1658 = vmatpush.bf16.msra.mxu0 %v1639
    %1659 = vmatpush.bf16.msra.mxu0 %v1638
    %1660 = vmatpush.bf16.msra.mxu0 %v1637
    %1661 = vmatmul.bf16.gmra.mxu0 %v1582
    %v1662 = vpop.f32.mrf.mxu0
    %v1663 = vadd.f32 %v1603, %v1662
    %v1664 = vpop.f32.mrf.mxu0
    %v1665 = vadd.f32 %v1603, %v1664
    %1666 = vdwg.mxu0
    %v1667 = vadd.f32 %v1506, %v1663
    %v1668 = vadd.f32 %v1507, %v1665
    %s1669 = scalar_lea.vmem [#allocation17], 1
    %v1670 = vld [vmem:[%s1669] sm:$0x1]
    %s1671 = scalar_lea.vmem %s16, 1
    %v1672 = vld [vmem:[%s1671] sm:$0x1]
    %v1673 = vsel %vm327, %v1667, 0.0
    %1674 = vadd.xlane.f32.xlu0 %v1673
    %v1675 = vpop.xlane.xlu0 %1674
    %v1676 = vsel %vm327, %v1668, 0.0
    %1677 = vadd.xlane.f32.xlu0 %v1676
    %v1678 = vpop.xlane.xlu0 %1677
    %v1679 = vmul.f32 %v1675, %v340
    %v1680 = vmul.f32 %v1678, %v340
    %v1681 = vsub.f32 %v1667, %v1679
    %v1682 = vsub.f32 %v1668, %v1680
    %v1683 = vmul.f32 %v1681, %v1681
    %v1684 = vmul.f32 %v1682, %v1682
    %v1685 = vsel %vm327, %v1683, 0.0
    %1686 = vadd.xlane.f32.xlu0 %v1685
    %v1687 = vpop.xlane.xlu0 %1686
    %v1688 = vsel %vm327, %v1684, 0.0
    %1689 = vadd.xlane.f32.xlu0 %v1688
    %v1690 = vpop.xlane.xlu0 %1689
    %v1691 = vmul.f32 %v1687, %v340
    %v1692 = vmul.f32 %v1690, %v340
    %v1693 = vadd.f32 %v1691, 1e-12
    %v1694 = vadd.f32 %v1692, 1e-12
    %v1695 = vrsqrt.pop %v1693
    %v1696 = vmul.f32 %v1695, %v1693
    %v1697 = vmul.f32 %v1696, %v1695
    %v1698 = vmul.f32 0.5, %v1697
    %v1699 = vsub.f32 1.5, %v1698
    %v1700 = vmul.f32 %v1695, %v1699
    %vm1701 = vweird.f32 %v1693
    %vm1702 = vweird.f32 %v1695
    %vm1703 = vmor %vm1701, %vm1702
    %v1704 = vsel %vm1703, %v1695, %v1700
    %v1705 = vrsqrt.pop %v1694
    %v1706 = vmul.f32 %v1705, %v1694
    %v1707 = vmul.f32 %v1706, %v1705
    %v1708 = vmul.f32 0.5, %v1707
    %v1709 = vsub.f32 1.5, %v1708
    %v1710 = vmul.f32 %v1705, %v1709
    %vm1711 = vweird.f32 %v1694
    %vm1712 = vweird.f32 %v1705
    %vm1713 = vmor %vm1711, %vm1712
    %v1714 = vsel %vm1713, %v1705, %v1710
    %v1715 = vmul.f32 %v1681, %v1704
    %v1716 = vmul.f32 %v1682, %v1714
    %v1718 = vperm.slane %v1670, 0
    %v1720 = vmul.f32 %v1715, %v1718
    %v1721 = vmul.f32 %v1716, %v1718
    %v1723 = vperm.slane %v1672, 0
    %v1725 = vadd.f32 %v1720, %v1723
    %v1726 = vadd.f32 %v1721, %v1723
    %v1728 = vrot.slane %v1726, 7
    %vm1730 = vcmask 1040384
    %v1731 = vsel %vm1730, %v1725, %v1728
    %v1732 = vpack.c.bf16 %v1731, %v1731
    %v1733 = vld [vmem:[%s17] sm:$0xf]
    %v1734 = vld [vmem:[%s17 + $0x4] sm:$0xf]
    %v1735 = vld [vmem:[%s17 + $0x8] sm:$0xf]
    %v1736 = vld [vmem:[%s17 + $0xc] sm:$0xf]
    %v1737 = vld [vmem:[%s17 + $0x10] sm:$0xf]
    %v1738 = vld [vmem:[%s17 + $0x14] sm:$0xf]
    %v1739 = vld [vmem:[%s17 + $0x18] sm:$0xf]
    %v1740 = vld [vmem:[%s17 + $0x1c] sm:$0xf]
    %v1741 = vld [vmem:[%s18] sm:$0x1]
    %v1743 = vperm.slane %v1741, 0
    %v1753 = vunpack.c.l.b16 %v1733
    %v1754 = vunpack.c.l.b16 %v1734
    %v1755 = vunpack.c.l.b16 %v1735
    %v1756 = vunpack.c.l.b16 %v1736
    %v1757 = vunpack.c.l.b16 %v1737
    %v1758 = vunpack.c.l.b16 %v1738
    %v1759 = vunpack.c.l.b16 %v1739
    %v1760 = vunpack.c.l.b16 %v1740
    %v1761 = vpack.c.b16 %v1754, %v1753
    %v1762 = vpack.c.b16 %v1756, %v1755
    %v1763 = vpack.c.b16 %v1758, %v1757
    %v1764 = vpack.c.b16 %v1760, %v1759
    %v1770 = vsel %vm327, %v1732, 0
    %1772 = vmatpush.bf16.msra.mxu0 0
    %1773 = vmatpush.bf16.msra.mxu0 0
    %1774 = vmatpush.bf16.msra.mxu0 0
    %1775 = vmatpush.bf16.msra.mxu0 0
    %1776 = vmatpush.bf16.msra.mxu0 %v1764
    %1777 = vmatpush.bf16.msra.mxu0 %v1763
    %1778 = vmatpush.bf16.msra.mxu0 %v1762
    %1779 = vmatpush.bf16.msra.mxu0 %v1761
    %1780 = vmatmul.bf16.gmra.mxu0 %v1770
    %v1781 = vpop.f32.mrf.mxu0
    %v1782 = vadd.f32 %v1743, %v1781
    %v1783 = vpop.f32.mrf.mxu0
    %1784 = vdwg.mxu0
    %v1785 = vtanh.pop %v1782
    %v1786 = vpack.c.bf16 %v1785, %v1785
    %v1787 = vld [vmem:[#allocation19] sm:$0xf]
    %v1788 = vld [vmem:[#allocation19 + $0x4] sm:$0xf]
    %v1789 = vld [vmem:[#allocation19 + $0x8] sm:$0xf]
    %v1790 = vld [vmem:[#allocation19 + $0xc] sm:$0xf]
    %v1791 = vld [vmem:[#allocation19 + $0x10] sm:$0xf]
    %v1792 = vld [vmem:[#allocation19 + $0x14] sm:$0xf]
    %v1793 = vld [vmem:[#allocation19 + $0x18] sm:$0xf]
    %v1794 = vld [vmem:[#allocation19 + $0x1c] sm:$0xf]
    %v1795 = vld [vmem:[%s20] sm:$0x1]
    %v1797 = vperm.slane %v1795, 0
    %v1807 = vunpack.c.l.b16 %v1787
    %v1808 = vunpack.c.l.b16 %v1788
    %v1809 = vunpack.c.l.b16 %v1789
    %v1810 = vunpack.c.l.b16 %v1790
    %v1811 = vunpack.c.l.b16 %v1791
    %v1812 = vunpack.c.l.b16 %v1792
    %v1813 = vunpack.c.l.b16 %v1793
    %v1814 = vunpack.c.l.b16 %v1794
    %v1815 = vpack.c.b16 %v1808, %v1807
    %v1816 = vpack.c.b16 %v1810, %v1809
    %v1817 = vpack.c.b16 %v1812, %v1811
    %v1818 = vpack.c.b16 %v1814, %v1813
    %v1824 = vsel %vm327, %v1786, 0
    %1826 = vmatpush.bf16.msra.mxu0 0
    %1827 = vmatpush.bf16.msra.mxu0 0
    %1828 = vmatpush.bf16.msra.mxu0 0
    %1829 = vmatpush.bf16.msra.mxu0 0
    %1830 = vmatpush.bf16.msra.mxu0 %v1818
    %1831 = vmatpush.bf16.msra.mxu0 %v1817
    %1832 = vmatpush.bf16.msra.mxu0 %v1816
    %1833 = vmatpush.bf16.msra.mxu0 %v1815
    %1834 = vmatmul.bf16.gmra.mxu0 %v1824
    %v1835 = vpop.f32.mrf.mxu0
    %v1836 = vadd.f32 %v1797, %v1835
    %v1837 = vpop.f32.mrf.mxu0
    %1838 = vdwg.mxu0
    %vm1839 = vcmask 1041408
    %v1840 = vsel %vm1839, %v1836, -inf
    %1841 = vmax.xlane.f32.xlu0 %v1840
    %v1842 = vpop.xlane.xlu0 %1841
    %v1843 = vsub.f32 %v1836, %v1842
    %v1844 = vmul.f32 %v1843, 1.442695
    %v1845 = vpow.pop %v1844
    %v1846 = vsel %vm1839, %v1845, 0.0
    %1847 = vadd.xlane.f32.xlu0 %v1846
    %v1848 = vpop.xlane.xlu0 %1847
    %v1849 = vrcp.pop %v1848
    %v1850 = vmul.f32 %v1848, %v1849
    %v1851 = vsub.f32 1.0, %v1850
    %v1852 = vmul.f32 %v1849, %v1851
    %v1853 = vadd.f32 %v1849, %v1852
    %vm1854 = vweird.f32 %v1848
    %vm1855 = vweird.f32 %v1849
    %vm1856 = vmor %vm1854, %vm1855
    %v1857 = vsel %vm1856, %v1849, %v1853
    %v1858 = vand.u32 2147483647, %v1848
    %vm1859 = vcmp.eq.f32.partialorder %v1858, 8.507059e+37
    %v1860 = vand.u32 %v1848, 2147483648
    %v1861 = vor.u32 1.1754944e-38, %v1860
    %v1862 = vsel %vm1859, %v1861, %v1857
    %v1863 = vmul.f32 %v1845, %v1862
    %1864 = vst [vmem:[#allocation20] sm:$0x3] %v1863
    // Predicated region
    $region130: #{tpu_custom_call.1} parent=1 // pred_check
      _
    $region131: #{tpu_custom_call.1} parent=1 // pred_check_branch
      %1866 = sbr.rel (0) target = $region133
    $region132: #{tpu_custom_call.1} parent=1 // pred_region
      %1868 = vsyncadd [#allocation4], 0
      %s1870 = sshll.u32 [#allocation20], 4
      %s1871 = int_to_ptr.vmem [resolvable:$true] %s1870
      %s1872 = sshll.u32 %s21, 4
      %s1873 = int_to_ptr.hbm [resolvable:$true] %s1872
      %1875 = dma.vmem_to_hbm [thread:$0]  %s1871, 32, %s1873, [#allocation4]
    $region133: #{tpu_custom_call.1} parent=1 // pred_fallthru
      _
    // Predicated region
    $region134: #{tpu_custom_call.1} parent=1 // pred_check
      _
    $region135: #{tpu_custom_call.1} parent=1 // pred_check_branch
      %1877 = sbr.rel (0) target = $region137
    $region136: #{tpu_custom_call.1} parent=1 // pred_region
      %1879 = dma.done [#allocation4], 32
    $region137: #{tpu_custom_call.1} parent=1 // pred_fallthru
      _
    %1880 = vsyncpa [#allocation3], 1
    %1881 = vsyncpa [#allocation6], 1
    %1882 = vsyncpa [#allocation9], 1
    %1883 = vsyncpa [#allocation12], 1
    %1884 = vsyncpa [#allocation15], 1
    %1885 = vsyncpa [#allocation18], 1
    %1886 = vsyncpa [#allocation4], 1

</llo_original>
